<compile_context>
chip_gen: v7x
topology: tpu7x:2x2x1
jax: 0.10.0
libtpu: 0.0.40
codegen_flags: <defaults>
</compile_context>

<pallas_src>
import jax
import jax.numpy as jnp
from jax.experimental import pallas as pl
from jax.experimental.pallas import tpu as pltpu


def lstm_predictor_kernel(x_ref, wpre_ref, wg_ref, bias_ref, hc0_ref, wfc_ref,
                          out_ref, hcn_ref, seq_scr):
    # x_ref: (T*B, D) bf16 (time-major rows: row index = t*B + b).
    # wg_ref: (L, H, 8H) bf16 = [W_ih | W_hh], gate blocks reordered [i,f,o,g].
    # bias_ref: (L+2, max(4H,O)) f32: rows 0..L-1 = b_ih+b_hh (reordered),
    #           row L = b_pre (first H cols), row L+1 = b_fc (first O cols).
    # hc0_ref / hcn_ref: (2L, B, H) f32 = [h0..,c0..] / [h_n..,c_n..] (aliased).
    TB, _ = x_ref.shape
    H = wpre_ref.shape[1]
    L = hcn_ref.shape[0] // 2
    B = hcn_ref.shape[1]
    T = TB // B
    O = out_ref.shape[1]

    biases = bias_ref[...]                              # (L+2, 4H) f32, tiny
    b_pre = biases[L:L + 1, :H]                         # (1, H)
    b_fc = biases[L + 1:L + 2, :O]                      # (1, O)

    # pre_fc + ReLU as ONE MXU matmul over all timesteps: (T*B, D) @ (D, H).
    xp = jnp.dot(x_ref[...], wpre_ref[...],
                 preferred_element_type=jnp.float32) + b_pre
    seq_scr[...] = jnp.maximum(xp, 0.0).astype(jnp.bfloat16)   # bf16 sequence

    h = hc0_ref[0]
    for layer in range(L):
        wg = wg_ref[layer]                              # (H, 8H) bf16
        w_ih = wg[:, :4 * H]                            # lane-dense 128 split
        w_hh = wg[:, 4 * H:]
        bg = biases[layer:layer + 1, :4 * H]            # (1, 4H)
        h = hc0_ref[layer]                              # (B, H) f32
        c = hc0_ref[L + layer]                          # (B, H) f32
        last_layer = (layer == L - 1)

        # Hoisted input projection for the whole sequence (one matmul), with
        # the combined PyTorch bias (b_ih + b_hh) folded in once.
        ix = jnp.dot(seq_scr[...], w_ih,
                     preferred_element_type=jnp.float32) + bg   # (T*B, 4H) f32

        # Sequential recurrence: only the h @ W_hh matmul + gate math remain.
        for t in range(T):
            gates = ix[t * B:(t + 1) * B, :] + jnp.dot(
                h.astype(jnp.bfloat16), w_hh,
                preferred_element_type=jnp.float32)             # (B, 4H) f32
            # Gate blocks are [i, f, o | g] (reordered in the wrapper), so one
            # sigmoid covers the whole 128-lane row; tanh only on the g block.
            sig = jax.nn.sigmoid(gates)
            i = sig[:, 0 * H:1 * H]
            f = sig[:, 1 * H:2 * H]
            o = sig[:, 2 * H:3 * H]
            g = jnp.tanh(gates[:, 3 * H:4 * H])
            c = f * c + i * g                                   # f32 cell state
            h = o * jnp.tanh(c)                                 # f32 hidden
            if not last_layer:
                # Packed bf16 single-vreg store; next layer's matmul input.
                seq_scr[t * B:(t + 1) * B, :] = h.astype(jnp.bfloat16)

        hcn_ref[layer] = h
        hcn_ref[L + layer] = c

    # fc on out[:, -1, :], which is exactly the final h of the top layer.
    out_ref[...] = (jnp.dot(h.astype(jnp.bfloat16), wfc_ref[...],
                            preferred_element_type=jnp.float32) + b_fc)


def _reorder_gates(a):
    """Permute the last-dim gate blocks from PyTorch [i,f,g,o] to [i,f,o,g]."""
    i, f, g, o = jnp.split(a, 4, axis=-1)
    return jnp.concatenate([i, f, o, g], axis=-1)


def compatible_lstm_predictor(x, params, h0, c0):
    B, T, D = x.shape
    H = params["w_pre"].shape[1]
    L = h0.shape[0]
    O = params["w_fc"].shape[1]
    bf16 = lambda a: a.astype(jnp.bfloat16)

    # Layout plumbing outside the kernel (all fused into the surrounding jit):
    # time-major, pre-flattened bf16 input.
    x_flat = bf16(jnp.transpose(x, (1, 0, 2)).reshape(T * B, D))

    # Pack W_ih | W_hh (gate-reordered) into one bf16 array: (L, H, 8H).
    w_gates = bf16(jnp.concatenate(
        [_reorder_gates(params["w_ih"]), _reorder_gates(params["w_hh"])],
        axis=-1))

    # Pack all biases into one f32 array: (L+2, max(4H, O)).
    bw = max(4 * H, O)
    bias_pack = jnp.zeros((L + 2, bw), jnp.float32)
    bias_pack = bias_pack.at[:L, :4 * H].set(
        _reorder_gates(params["b_ih"] + params["b_hh"]))
    bias_pack = bias_pack.at[L, :H].set(params["b_pre"][0])
    bias_pack = bias_pack.at[L + 1, :O].set(params["b_fc"][0])

    # Pack h0/c0 into one array so a single DMA + a single aliased output
    # carries the recurrent state.
    hc0 = jnp.concatenate([h0, c0], axis=0)                     # (2L, B, H)

    vmem = pl.BlockSpec(memory_space=pltpu.MemorySpace.VMEM)
    out_shape = (
        jax.ShapeDtypeStruct((B, O), jnp.float32),              # fc output
        jax.ShapeDtypeStruct((2 * L, B, H), jnp.float32),       # [h_n, c_n]
    )
    out, hc_n = pl.pallas_call(
        lstm_predictor_kernel,
        out_shape=out_shape,
        in_specs=[vmem] * 6,
        out_specs=(vmem, vmem),
        scratch_shapes=[pltpu.VMEM((T * B, H), jnp.bfloat16)],  # bf16 sequence
        input_output_aliases={4: 1},                            # hc0 -> hc_n
    )(x_flat, bf16(params["w_pre"]), w_gates, bias_pack, hc0,
      bf16(params["w_fc"]))
    return out, hc_n[:L], hc_n[L:]


def reference_forward(x, params, h0, c0):
    """Pure-JAX f32 reference of the PyTorch forward pass (for verification)."""
    H = params["w_pre"].shape[1]
    seq = jax.nn.relu(x @ params["w_pre"] + params["b_pre"][0])
    hs, cs = [], []
    for layer in range(h0.shape[0]):
        h, c = h0[layer], c0[layer]
        b = params["b_ih"][layer] + params["b_hh"][layer]
        outs = []
        for t in range(x.shape[1]):
            gates = seq[:, t, :] @ params["w_ih"][layer] + h @ params["w_hh"][layer] + b
            i = jax.nn.sigmoid(gates[:, :H])
            f = jax.nn.sigmoid(gates[:, H:2 * H])
            g = jnp.tanh(gates[:, 2 * H:3 * H])
            o = jax.nn.sigmoid(gates[:, 3 * H:])
            c = f * c + i * g
            h = o * jnp.tanh(c)
            outs.append(h)
        seq = jnp.stack(outs, axis=1)
        hs.append(h)
        cs.append(c)
    out = seq[:, -1, :] @ params["w_fc"] + params["b_fc"][0]
    return out, jnp.stack(hs), jnp.stack(cs)


def init_params(key, input_dim, hidden_dim, output_dim, n_layers):
    ks = jax.random.split(key, 8)
    s = 0.1
    return {
        # pre_fc
        "w_pre": s * jax.random.normal(ks[0], (input_dim, hidden_dim), jnp.float32),
        "b_pre": s * jax.random.normal(ks[1], (1, hidden_dim), jnp.float32),
        # LSTM (all layers have input size hidden_dim because of pre_fc)
        "w_ih": s * jax.random.normal(ks[2], (n_layers, hidden_dim, 4 * hidden_dim), jnp.float32),
        "w_hh": s * jax.random.normal(ks[3], (n_layers, hidden_dim, 4 * hidden_dim), jnp.float32),
        "b_ih": s * jax.random.normal(ks[4], (n_layers, 4 * hidden_dim), jnp.float32),
        "b_hh": s * jax.random.normal(ks[5], (n_layers, 4 * hidden_dim), jnp.float32),
        # fc
        "w_fc": s * jax.random.normal(ks[6], (hidden_dim, output_dim), jnp.float32),
        "b_fc": s * jax.random.normal(ks[7], (1, output_dim), jnp.float32),
    }


if __name__ == "__main__":
    B, T = 2, 8
    input_dim, hidden_dim, output_dim, n_layers = 4, 32, 3, 2

    key = jax.random.PRNGKey(0)
    k_x, k_p = jax.random.split(key)
    x = jax.random.normal(k_x, (B, T, input_dim), jnp.float32)
    params = init_params(k_p, input_dim, hidden_dim, output_dim, n_layers)

    # init_hidden(batch_size=B): zeros of shape (n_layers, B, hidden_dim)
    h0 = jnp.zeros((n_layers, B, hidden_dim), jnp.float32)
    c0 = jnp.zeros((n_layers, B, hidden_dim), jnp.float32)

    out, h_n, c_n = jax.jit(compatible_lstm_predictor)(x, params, h0, c0)
    jax.block_until_ready((out, h_n, c_n))

    ref_out, ref_h, ref_c = reference_forward(x, params, h0, c0)
    # bf16 MXU inputs / bf16 inter-layer sequence (f32 accumulation & state)
    # vs. pure-f32 reference: expect agreement to a few 1e-3.
    assert jnp.allclose(out, ref_out, atol=2e-2), "fc output mismatch"
    assert jnp.allclose(h_n, ref_h, atol=2e-2), "h_n mismatch"
    assert jnp.allclose(c_n, ref_c, atol=2e-2), "c_n mismatch"

    print("KERNEL_OK")
</pallas_src>

<mosaic_0001>
module attributes {stable_mosaic.version = 11 : i64} {
  func.func @lstm_predictor_kernel(%arg0: memref<16x4xbf16, #tpu.memory_space<vmem>>, %arg1: memref<4x32xbf16, #tpu.memory_space<vmem>>, %arg2: memref<2x32x256xbf16, #tpu.memory_space<vmem>>, %arg3: memref<4x128xf32, #tpu.memory_space<vmem>>, %arg4: memref<4x2x32xf32, #tpu.memory_space<vmem>>, %arg5: memref<32x3xbf16, #tpu.memory_space<vmem>>, %arg6: memref<2x3xf32, #tpu.memory_space<vmem>>, %arg7: memref<4x2x32xf32, #tpu.memory_space<vmem>>, %arg8: memref<16x32xbf16, #tpu.memory_space<vmem>>) attributes {dimension_semantics = [], scalar_prefetch = 0 : i64, scratch_operands = 1 : i64, tpu.core_type = #tpu.core_type<tc>} {
    %c0 = arith.constant 0 : index
    %c0_0 = arith.constant 0 : index
    %0 = vector.load %arg3[%c0, %c0_0] : memref<4x128xf32, #tpu.memory_space<vmem>>, vector<4x128xf32>
    %1 = vector.extract_strided_slice %0 {offsets = [2, 0], sizes = [1, 32], strides = [1, 1]} : vector<4x128xf32> to vector<1x32xf32>
    %2 = vector.extract_strided_slice %0 {offsets = [3, 0], sizes = [1, 3], strides = [1, 1]} : vector<4x128xf32> to vector<1x3xf32>
    %c0_1 = arith.constant 0 : index
    %c0_2 = arith.constant 0 : index
    %3 = vector.load %arg0[%c0_1, %c0_2] : memref<16x4xbf16, #tpu.memory_space<vmem>>, vector<16x4xbf16>
    %c0_3 = arith.constant 0 : index
    %c0_4 = arith.constant 0 : index
    %4 = vector.load %arg1[%c0_3, %c0_4] : memref<4x32xbf16, #tpu.memory_space<vmem>>, vector<4x32xbf16>
    %cst = arith.constant dense<0.000000e+00> : vector<16x32xf32>
    %5 = tpu.matmul %3, %4, %cst {dimension_numbers = #tpu.dot_dimension_numbers<[1], [0], [0], [1], [0, 0, 1, 1], [], []>} : vector<16x4xbf16>, vector<4x32xbf16>, vector<16x32xf32> -> vector<16x32xf32>
    %6 = vector.broadcast %1 : vector<1x32xf32> to vector<16x32xf32>
    %7 = arith.addf %5, %6 : vector<16x32xf32>
    %cst_5 = arith.constant 0.000000e+00 : f32
    %8 = vector.broadcast %cst_5 : f32 to vector<16x32xf32>
    %9 = arith.maximumf %7, %8 : vector<16x32xf32>
    %10 = arith.truncf %9 : vector<16x32xf32> to vector<16x32xbf16>
    %c0_6 = arith.constant 0 : index
    %c0_7 = arith.constant 0 : index
    %11 = vector.load %arg8[%c0_6, %c0_7] : memref<16x32xbf16, #tpu.memory_space<vmem>>, vector<16x32xbf16>
    tpu.vector_store %arg8[%c0_6, %c0_7], %10 {strides = array<i32>} : memref<16x32xbf16, #tpu.memory_space<vmem>>, vector<16x32xbf16>,
    %c0_8 = arith.constant 0 : index
    %c0_9 = arith.constant 0 : index
    %c0_10 = arith.constant 0 : index
    %12 = vector.load %arg2[%c0_8, %c0_9, %c0_10] : memref<2x32x256xbf16, #tpu.memory_space<vmem>>, vector<1x32x256xbf16>
    %13 = vector.shape_cast %12 : vector<1x32x256xbf16> to vector<32x256xbf16>
    %14 = vector.extract_strided_slice %13 {offsets = [0, 0], sizes = [32, 128], strides = [1, 1]} : vector<32x256xbf16> to vector<32x128xbf16>
    %15 = vector.extract_strided_slice %13 {offsets = [0, 128], sizes = [32, 128], strides = [1, 1]} : vector<32x256xbf16> to vector<32x128xbf16>
    %16 = vector.extract_strided_slice %0 {offsets = [0, 0], sizes = [1, 128], strides = [1, 1]} : vector<4x128xf32> to vector<1x128xf32>
    %c0_11 = arith.constant 0 : index
    %c0_12 = arith.constant 0 : index
    %c0_13 = arith.constant 0 : index
    %17 = vector.load %arg4[%c0_11, %c0_12, %c0_13] : memref<4x2x32xf32, #tpu.memory_space<vmem>>, vector<1x2x32xf32>
    %18 = vector.shape_cast %17 : vector<1x2x32xf32> to vector<2x32xf32>
    %c2 = arith.constant 2 : index
    %c0_14 = arith.constant 0 : index
    %c0_15 = arith.constant 0 : index
    %19 = vector.load %arg4[%c2, %c0_14, %c0_15] : memref<4x2x32xf32, #tpu.memory_space<vmem>>, vector<1x2x32xf32>
    %20 = vector.shape_cast %19 : vector<1x2x32xf32> to vector<2x32xf32>
    %c0_16 = arith.constant 0 : index
    %c0_17 = arith.constant 0 : index
    %21 = vector.load %arg8[%c0_16, %c0_17] : memref<16x32xbf16, #tpu.memory_space<vmem>>, vector<16x32xbf16>
    %cst_18 = arith.constant dense<0.000000e+00> : vector<16x128xf32>
    %22 = tpu.matmul %21, %14, %cst_18 {dimension_numbers = #tpu.dot_dimension_numbers<[1], [0], [0], [1], [0, 0, 1, 1], [], []>} : vector<16x32xbf16>, vector<32x128xbf16>, vector<16x128xf32> -> vector<16x128xf32>
    %23 = vector.broadcast %16 : vector<1x128xf32> to vector<16x128xf32>
    %24 = arith.addf %22, %23 : vector<16x128xf32>
    %25 = vector.extract_strided_slice %24 {offsets = [0, 0], sizes = [2, 128], strides = [1, 1]} : vector<16x128xf32> to vector<2x128xf32>
    %26 = arith.truncf %18 : vector<2x32xf32> to vector<2x32xbf16>
    %cst_19 = arith.constant dense<0.000000e+00> : vector<2x128xf32>
    %27 = tpu.matmul %26, %15, %cst_19 {dimension_numbers = #tpu.dot_dimension_numbers<[1], [0], [0], [1], [0, 0, 1, 1], [], []>} : vector<2x32xbf16>, vector<32x128xbf16>, vector<2x128xf32> -> vector<2x128xf32>
    %28 = arith.addf %25, %27 : vector<2x128xf32>
    %29 = arith.negf %28 : vector<2x128xf32>
    %30 = math.exp %29 : vector<2x128xf32>
    %cst_20 = arith.constant 1.000000e+00 : f32
    %31 = vector.broadcast %cst_20 : f32 to vector<2x128xf32>
    %32 = arith.addf %31, %30 : vector<2x128xf32>
    %33 = arith.divf %31, %32 : vector<2x128xf32>
    %34 = vector.extract_strided_slice %33 {offsets = [0, 0], sizes = [2, 32], strides = [1, 1]} : vector<2x128xf32> to vector<2x32xf32>
    %35 = vector.extract_strided_slice %33 {offsets = [0, 32], sizes = [2, 32], strides = [1, 1]} : vector<2x128xf32> to vector<2x32xf32>
    %36 = vector.extract_strided_slice %33 {offsets = [0, 64], sizes = [2, 32], strides = [1, 1]} : vector<2x128xf32> to vector<2x32xf32>
    %37 = vector.extract_strided_slice %28 {offsets = [0, 96], sizes = [2, 32], strides = [1, 1]} : vector<2x128xf32> to vector<2x32xf32>
    %38 = math.tanh %37 : vector<2x32xf32>
    %39 = arith.mulf %35, %20 : vector<2x32xf32>
    %40 = arith.mulf %34, %38 : vector<2x32xf32>
    %41 = arith.addf %39, %40 : vector<2x32xf32>
    %42 = math.tanh %41 : vector<2x32xf32>
    %43 = arith.mulf %36, %42 : vector<2x32xf32>
    %44 = arith.truncf %43 : vector<2x32xf32> to vector<2x32xbf16>
    %c0_21 = arith.constant 0 : index
    %c0_22 = arith.constant 0 : index
    %45 = vector.load %arg8[%c0_21, %c0_22] : memref<16x32xbf16, #tpu.memory_space<vmem>>, vector<2x32xbf16>
    tpu.vector_store %arg8[%c0_21, %c0_22], %44 {strides = array<i32>} : memref<16x32xbf16, #tpu.memory_space<vmem>>, vector<2x32xbf16>,
    %46 = vector.extract_strided_slice %24 {offsets = [2, 0], sizes = [2, 128], strides = [1, 1]} : vector<16x128xf32> to vector<2x128xf32>
    %47 = arith.truncf %43 : vector<2x32xf32> to vector<2x32xbf16>
    %cst_23 = arith.constant dense<0.000000e+00> : vector<2x128xf32>
    %48 = tpu.matmul %47, %15, %cst_23 {dimension_numbers = #tpu.dot_dimension_numbers<[1], [0], [0], [1], [0, 0, 1, 1], [], []>} : vector<2x32xbf16>, vector<32x128xbf16>, vector<2x128xf32> -> vector<2x128xf32>
    %49 = arith.addf %46, %48 : vector<2x128xf32>
    %50 = arith.negf %49 : vector<2x128xf32>
    %51 = math.exp %50 : vector<2x128xf32>
    %cst_24 = arith.constant 1.000000e+00 : f32
    %52 = vector.broadcast %cst_24 : f32 to vector<2x128xf32>
    %53 = arith.addf %52, %51 : vector<2x128xf32>
    %54 = arith.divf %52, %53 : vector<2x128xf32>
    %55 = vector.extract_strided_slice %54 {offsets = [0, 0], sizes = [2, 32], strides = [1, 1]} : vector<2x128xf32> to vector<2x32xf32>
    %56 = vector.extract_strided_slice %54 {offsets = [0, 32], sizes = [2, 32], strides = [1, 1]} : vector<2x128xf32> to vector<2x32xf32>
    %57 = vector.extract_strided_slice %54 {offsets = [0, 64], sizes = [2, 32], strides = [1, 1]} : vector<2x128xf32> to vector<2x32xf32>
    %58 = vector.extract_strided_slice %49 {offsets = [0, 96], sizes = [2, 32], strides = [1, 1]} : vector<2x128xf32> to vector<2x32xf32>
    %59 = math.tanh %58 : vector<2x32xf32>
    %60 = arith.mulf %56, %41 : vector<2x32xf32>
    %61 = arith.mulf %55, %59 : vector<2x32xf32>
    %62 = arith.addf %60, %61 : vector<2x32xf32>
    %63 = math.tanh %62 : vector<2x32xf32>
    %64 = arith.mulf %57, %63 : vector<2x32xf32>
    %65 = arith.truncf %64 : vector<2x32xf32> to vector<2x32xbf16>
    %c2_25 = arith.constant 2 : index
    %c0_26 = arith.constant 0 : index
    %66 = vector.load %arg8[%c2_25, %c0_26] : memref<16x32xbf16, #tpu.memory_space<vmem>>, vector<2x32xbf16>
    tpu.vector_store %arg8[%c2_25, %c0_26], %65 {strides = array<i32>} : memref<16x32xbf16, #tpu.memory_space<vmem>>, vector<2x32xbf16>,
    %67 = vector.extract_strided_slice %24 {offsets = [4, 0], sizes = [2, 128], strides = [1, 1]} : vector<16x128xf32> to vector<2x128xf32>
    %68 = arith.truncf %64 : vector<2x32xf32> to vector<2x32xbf16>
    %cst_27 = arith.constant dense<0.000000e+00> : vector<2x128xf32>
    %69 = tpu.matmul %68, %15, %cst_27 {dimension_numbers = #tpu.dot_dimension_numbers<[1], [0], [0], [1], [0, 0, 1, 1], [], []>} : vector<2x32xbf16>, vector<32x128xbf16>, vector<2x128xf32> -> vector<2x128xf32>
    %70 = arith.addf %67, %69 : vector<2x128xf32>
    %71 = arith.negf %70 : vector<2x128xf32>
    %72 = math.exp %71 : vector<2x128xf32>
    %cst_28 = arith.constant 1.000000e+00 : f32
    %73 = vector.broadcast %cst_28 : f32 to vector<2x128xf32>
    %74 = arith.addf %73, %72 : vector<2x128xf32>
    %75 = arith.divf %73, %74 : vector<2x128xf32>
    %76 = vector.extract_strided_slice %75 {offsets = [0, 0], sizes = [2, 32], strides = [1, 1]} : vector<2x128xf32> to vector<2x32xf32>
    %77 = vector.extract_strided_slice %75 {offsets = [0, 32], sizes = [2, 32], strides = [1, 1]} : vector<2x128xf32> to vector<2x32xf32>
    %78 = vector.extract_strided_slice %75 {offsets = [0, 64], sizes = [2, 32], strides = [1, 1]} : vector<2x128xf32> to vector<2x32xf32>
    %79 = vector.extract_strided_slice %70 {offsets = [0, 96], sizes = [2, 32], strides = [1, 1]} : vector<2x128xf32> to vector<2x32xf32>
    %80 = math.tanh %79 : vector<2x32xf32>
    %81 = arith.mulf %77, %62 : vector<2x32xf32>
    %82 = arith.mulf %76, %80 : vector<2x32xf32>
    %83 = arith.addf %81, %82 : vector<2x32xf32>
    %84 = math.tanh %83 : vector<2x32xf32>
    %85 = arith.mulf %78, %84 : vector<2x32xf32>
    %86 = arith.truncf %85 : vector<2x32xf32> to vector<2x32xbf16>
    %c4 = arith.constant 4 : index
    %c0_29 = arith.constant 0 : index
    %87 = vector.load %arg8[%c4, %c0_29] : memref<16x32xbf16, #tpu.memory_space<vmem>>, vector<2x32xbf16>
    tpu.vector_store %arg8[%c4, %c0_29], %86 {strides = array<i32>} : memref<16x32xbf16, #tpu.memory_space<vmem>>, vector<2x32xbf16>,
    %88 = vector.extract_strided_slice %24 {offsets = [6, 0], sizes = [2, 128], strides = [1, 1]} : vector<16x128xf32> to vector<2x128xf32>
    %89 = arith.truncf %85 : vector<2x32xf32> to vector<2x32xbf16>
    %cst_30 = arith.constant dense<0.000000e+00> : vector<2x128xf32>
    %90 = tpu.matmul %89, %15, %cst_30 {dimension_numbers = #tpu.dot_dimension_numbers<[1], [0], [0], [1], [0, 0, 1, 1], [], []>} : vector<2x32xbf16>, vector<32x128xbf16>, vector<2x128xf32> -> vector<2x128xf32>
    %91 = arith.addf %88, %90 : vector<2x128xf32>
    %92 = arith.negf %91 : vector<2x128xf32>
    %93 = math.exp %92 : vector<2x128xf32>
    %cst_31 = arith.constant 1.000000e+00 : f32
    %94 = vector.broadcast %cst_31 : f32 to vector<2x128xf32>
    %95 = arith.addf %94, %93 : vector<2x128xf32>
    %96 = arith.divf %94, %95 : vector<2x128xf32>
    %97 = vector.extract_strided_slice %96 {offsets = [0, 0], sizes = [2, 32], strides = [1, 1]} : vector<2x128xf32> to vector<2x32xf32>
    %98 = vector.extract_strided_slice %96 {offsets = [0, 32], sizes = [2, 32], strides = [1, 1]} : vector<2x128xf32> to vector<2x32xf32>
    %99 = vector.extract_strided_slice %96 {offsets = [0, 64], sizes = [2, 32], strides = [1, 1]} : vector<2x128xf32> to vector<2x32xf32>
    %100 = vector.extract_strided_slice %91 {offsets = [0, 96], sizes = [2, 32], strides = [1, 1]} : vector<2x128xf32> to vector<2x32xf32>
    %101 = math.tanh %100 : vector<2x32xf32>
    %102 = arith.mulf %98, %83 : vector<2x32xf32>
    %103 = arith.mulf %97, %101 : vector<2x32xf32>
    %104 = arith.addf %102, %103 : vector<2x32xf32>
    %105 = math.tanh %104 : vector<2x32xf32>
    %106 = arith.mulf %99, %105 : vector<2x32xf32>
    %107 = arith.truncf %106 : vector<2x32xf32> to vector<2x32xbf16>
    %c6 = arith.constant 6 : index
    %c0_32 = arith.constant 0 : index
    %108 = vector.load %arg8[%c6, %c0_32] : memref<16x32xbf16, #tpu.memory_space<vmem>>, vector<2x32xbf16>
    tpu.vector_store %arg8[%c6, %c0_32], %107 {strides = array<i32>} : memref<16x32xbf16, #tpu.memory_space<vmem>>, vector<2x32xbf16>,
    %109 = vector.extract_strided_slice %24 {offsets = [8, 0], sizes = [2, 128], strides = [1, 1]} : vector<16x128xf32> to vector<2x128xf32>
    %110 = arith.truncf %106 : vector<2x32xf32> to vector<2x32xbf16>
    %cst_33 = arith.constant dense<0.000000e+00> : vector<2x128xf32>
    %111 = tpu.matmul %110, %15, %cst_33 {dimension_numbers = #tpu.dot_dimension_numbers<[1], [0], [0], [1], [0, 0, 1, 1], [], []>} : vector<2x32xbf16>, vector<32x128xbf16>, vector<2x128xf32> -> vector<2x128xf32>
    %112 = arith.addf %109, %111 : vector<2x128xf32>
    %113 = arith.negf %112 : vector<2x128xf32>
    %114 = math.exp %113 : vector<2x128xf32>
    %cst_34 = arith.constant 1.000000e+00 : f32
    %115 = vector.broadcast %cst_34 : f32 to vector<2x128xf32>
    %116 = arith.addf %115, %114 : vector<2x128xf32>
    %117 = arith.divf %115, %116 : vector<2x128xf32>
    %118 = vector.extract_strided_slice %117 {offsets = [0, 0], sizes = [2, 32], strides = [1, 1]} : vector<2x128xf32> to vector<2x32xf32>
    %119 = vector.extract_strided_slice %117 {offsets = [0, 32], sizes = [2, 32], strides = [1, 1]} : vector<2x128xf32> to vector<2x32xf32>
    %120 = vector.extract_strided_slice %117 {offsets = [0, 64], sizes = [2, 32], strides = [1, 1]} : vector<2x128xf32> to vector<2x32xf32>
    %121 = vector.extract_strided_slice %112 {offsets = [0, 96], sizes = [2, 32], strides = [1, 1]} : vector<2x128xf32> to vector<2x32xf32>
    %122 = math.tanh %121 : vector<2x32xf32>
    %123 = arith.mulf %119, %104 : vector<2x32xf32>
    %124 = arith.mulf %118, %122 : vector<2x32xf32>
    %125 = arith.addf %123, %124 : vector<2x32xf32>
    %126 = math.tanh %125 : vector<2x32xf32>
    %127 = arith.mulf %120, %126 : vector<2x32xf32>
    %128 = arith.truncf %127 : vector<2x32xf32> to vector<2x32xbf16>
    %c8 = arith.constant 8 : index
    %c0_35 = arith.constant 0 : index
    %129 = vector.load %arg8[%c8, %c0_35] : memref<16x32xbf16, #tpu.memory_space<vmem>>, vector<2x32xbf16>
    tpu.vector_store %arg8[%c8, %c0_35], %128 {strides = array<i32>} : memref<16x32xbf16, #tpu.memory_space<vmem>>, vector<2x32xbf16>,
    %130 = vector.extract_strided_slice %24 {offsets = [10, 0], sizes = [2, 128], strides = [1, 1]} : vector<16x128xf32> to vector<2x128xf32>
    %131 = arith.truncf %127 : vector<2x32xf32> to vector<2x32xbf16>
    %cst_36 = arith.constant dense<0.000000e+00> : vector<2x128xf32>
    %132 = tpu.matmul %131, %15, %cst_36 {dimension_numbers = #tpu.dot_dimension_numbers<[1], [0], [0], [1], [0, 0, 1, 1], [], []>} : vector<2x32xbf16>, vector<32x128xbf16>, vector<2x128xf32> -> vector<2x128xf32>
    %133 = arith.addf %130, %132 : vector<2x128xf32>
    %134 = arith.negf %133 : vector<2x128xf32>
    %135 = math.exp %134 : vector<2x128xf32>
    %cst_37 = arith.constant 1.000000e+00 : f32
    %136 = vector.broadcast %cst_37 : f32 to vector<2x128xf32>
    %137 = arith.addf %136, %135 : vector<2x128xf32>
    %138 = arith.divf %136, %137 : vector<2x128xf32>
    %139 = vector.extract_strided_slice %138 {offsets = [0, 0], sizes = [2, 32], strides = [1, 1]} : vector<2x128xf32> to vector<2x32xf32>
    %140 = vector.extract_strided_slice %138 {offsets = [0, 32], sizes = [2, 32], strides = [1, 1]} : vector<2x128xf32> to vector<2x32xf32>
    %141 = vector.extract_strided_slice %138 {offsets = [0, 64], sizes = [2, 32], strides = [1, 1]} : vector<2x128xf32> to vector<2x32xf32>
    %142 = vector.extract_strided_slice %133 {offsets = [0, 96], sizes = [2, 32], strides = [1, 1]} : vector<2x128xf32> to vector<2x32xf32>
    %143 = math.tanh %142 : vector<2x32xf32>
    %144 = arith.mulf %140, %125 : vector<2x32xf32>
    %145 = arith.mulf %139, %143 : vector<2x32xf32>
    %146 = arith.addf %144, %145 : vector<2x32xf32>
    %147 = math.tanh %146 : vector<2x32xf32>
    %148 = arith.mulf %141, %147 : vector<2x32xf32>
    %149 = arith.truncf %148 : vector<2x32xf32> to vector<2x32xbf16>
    %c10 = arith.constant 10 : index
    %c0_38 = arith.constant 0 : index
    %150 = vector.load %arg8[%c10, %c0_38] : memref<16x32xbf16, #tpu.memory_space<vmem>>, vector<2x32xbf16>
    tpu.vector_store %arg8[%c10, %c0_38], %149 {strides = array<i32>} : memref<16x32xbf16, #tpu.memory_space<vmem>>, vector<2x32xbf16>,
    %151 = vector.extract_strided_slice %24 {offsets = [12, 0], sizes = [2, 128], strides = [1, 1]} : vector<16x128xf32> to vector<2x128xf32>
    %152 = arith.truncf %148 : vector<2x32xf32> to vector<2x32xbf16>
    %cst_39 = arith.constant dense<0.000000e+00> : vector<2x128xf32>
    %153 = tpu.matmul %152, %15, %cst_39 {dimension_numbers = #tpu.dot_dimension_numbers<[1], [0], [0], [1], [0, 0, 1, 1], [], []>} : vector<2x32xbf16>, vector<32x128xbf16>, vector<2x128xf32> -> vector<2x128xf32>
    %154 = arith.addf %151, %153 : vector<2x128xf32>
    %155 = arith.negf %154 : vector<2x128xf32>
    %156 = math.exp %155 : vector<2x128xf32>
    %cst_40 = arith.constant 1.000000e+00 : f32
    %157 = vector.broadcast %cst_40 : f32 to vector<2x128xf32>
    %158 = arith.addf %157, %156 : vector<2x128xf32>
    %159 = arith.divf %157, %158 : vector<2x128xf32>
    %160 = vector.extract_strided_slice %159 {offsets = [0, 0], sizes = [2, 32], strides = [1, 1]} : vector<2x128xf32> to vector<2x32xf32>
    %161 = vector.extract_strided_slice %159 {offsets = [0, 32], sizes = [2, 32], strides = [1, 1]} : vector<2x128xf32> to vector<2x32xf32>
    %162 = vector.extract_strided_slice %159 {offsets = [0, 64], sizes = [2, 32], strides = [1, 1]} : vector<2x128xf32> to vector<2x32xf32>
    %163 = vector.extract_strided_slice %154 {offsets = [0, 96], sizes = [2, 32], strides = [1, 1]} : vector<2x128xf32> to vector<2x32xf32>
    %164 = math.tanh %163 : vector<2x32xf32>
    %165 = arith.mulf %161, %146 : vector<2x32xf32>
    %166 = arith.mulf %160, %164 : vector<2x32xf32>
    %167 = arith.addf %165, %166 : vector<2x32xf32>
    %168 = math.tanh %167 : vector<2x32xf32>
    %169 = arith.mulf %162, %168 : vector<2x32xf32>
    %170 = arith.truncf %169 : vector<2x32xf32> to vector<2x32xbf16>
    %c12 = arith.constant 12 : index
    %c0_41 = arith.constant 0 : index
    %171 = vector.load %arg8[%c12, %c0_41] : memref<16x32xbf16, #tpu.memory_space<vmem>>, vector<2x32xbf16>
    tpu.vector_store %arg8[%c12, %c0_41], %170 {strides = array<i32>} : memref<16x32xbf16, #tpu.memory_space<vmem>>, vector<2x32xbf16>,
    %172 = vector.extract_strided_slice %24 {offsets = [14, 0], sizes = [2, 128], strides = [1, 1]} : vector<16x128xf32> to vector<2x128xf32>
    %173 = arith.truncf %169 : vector<2x32xf32> to vector<2x32xbf16>
    %cst_42 = arith.constant dense<0.000000e+00> : vector<2x128xf32>
    %174 = tpu.matmul %173, %15, %cst_42 {dimension_numbers = #tpu.dot_dimension_numbers<[1], [0], [0], [1], [0, 0, 1, 1], [], []>} : vector<2x32xbf16>, vector<32x128xbf16>, vector<2x128xf32> -> vector<2x128xf32>
    %175 = arith.addf %172, %174 : vector<2x128xf32>
    %176 = arith.negf %175 : vector<2x128xf32>
    %177 = math.exp %176 : vector<2x128xf32>
    %cst_43 = arith.constant 1.000000e+00 : f32
    %178 = vector.broadcast %cst_43 : f32 to vector<2x128xf32>
    %179 = arith.addf %178, %177 : vector<2x128xf32>
    %180 = arith.divf %178, %179 : vector<2x128xf32>
    %181 = vector.extract_strided_slice %180 {offsets = [0, 0], sizes = [2, 32], strides = [1, 1]} : vector<2x128xf32> to vector<2x32xf32>
    %182 = vector.extract_strided_slice %180 {offsets = [0, 32], sizes = [2, 32], strides = [1, 1]} : vector<2x128xf32> to vector<2x32xf32>
    %183 = vector.extract_strided_slice %180 {offsets = [0, 64], sizes = [2, 32], strides = [1, 1]} : vector<2x128xf32> to vector<2x32xf32>
    %184 = vector.extract_strided_slice %175 {offsets = [0, 96], sizes = [2, 32], strides = [1, 1]} : vector<2x128xf32> to vector<2x32xf32>
    %185 = math.tanh %184 : vector<2x32xf32>
    %186 = arith.mulf %182, %167 : vector<2x32xf32>
    %187 = arith.mulf %181, %185 : vector<2x32xf32>
    %188 = arith.addf %186, %187 : vector<2x32xf32>
    %189 = math.tanh %188 : vector<2x32xf32>
    %190 = arith.mulf %183, %189 : vector<2x32xf32>
    %191 = arith.truncf %190 : vector<2x32xf32> to vector<2x32xbf16>
    %c14 = arith.constant 14 : index
    %c0_44 = arith.constant 0 : index
    %192 = vector.load %arg8[%c14, %c0_44] : memref<16x32xbf16, #tpu.memory_space<vmem>>, vector<2x32xbf16>
    tpu.vector_store %arg8[%c14, %c0_44], %191 {strides = array<i32>} : memref<16x32xbf16, #tpu.memory_space<vmem>>, vector<2x32xbf16>,
    %c0_45 = arith.constant 0 : index
    %c0_46 = arith.constant 0 : index
    %c0_47 = arith.constant 0 : index
    %193 = vector.load %arg7[%c0_45, %c0_46, %c0_47] : memref<4x2x32xf32, #tpu.memory_space<vmem>>, vector<1x2x32xf32>
    %194 = vector.shape_cast %193 : vector<1x2x32xf32> to vector<2x32xf32>
    %195 = vector.shape_cast %190 : vector<2x32xf32> to vector<1x2x32xf32>
    tpu.vector_store %arg7[%c0_45, %c0_46, %c0_47], %195 {strides = array<i32>} : memref<4x2x32xf32, #tpu.memory_space<vmem>>, vector<1x2x32xf32>,
    %c2_48 = arith.constant 2 : index
    %c0_49 = arith.constant 0 : index
    %c0_50 = arith.constant 0 : index
    %196 = vector.load %arg7[%c2_48, %c0_49, %c0_50] : memref<4x2x32xf32, #tpu.memory_space<vmem>>, vector<1x2x32xf32>
    %197 = vector.shape_cast %196 : vector<1x2x32xf32> to vector<2x32xf32>
    %198 = vector.shape_cast %188 : vector<2x32xf32> to vector<1x2x32xf32>
    tpu.vector_store %arg7[%c2_48, %c0_49, %c0_50], %198 {strides = array<i32>} : memref<4x2x32xf32, #tpu.memory_space<vmem>>, vector<1x2x32xf32>,
    %c1 = arith.constant 1 : index
    %c0_51 = arith.constant 0 : index
    %c0_52 = arith.constant 0 : index
    %199 = vector.load %arg2[%c1, %c0_51, %c0_52] : memref<2x32x256xbf16, #tpu.memory_space<vmem>>, vector<1x32x256xbf16>
    %200 = vector.shape_cast %199 : vector<1x32x256xbf16> to vector<32x256xbf16>
    %201 = vector.extract_strided_slice %200 {offsets = [0, 0], sizes = [32, 128], strides = [1, 1]} : vector<32x256xbf16> to vector<32x128xbf16>
    %202 = vector.extract_strided_slice %200 {offsets = [0, 128], sizes = [32, 128], strides = [1, 1]} : vector<32x256xbf16> to vector<32x128xbf16>
    %203 = vector.extract_strided_slice %0 {offsets = [1, 0], sizes = [1, 128], strides = [1, 1]} : vector<4x128xf32> to vector<1x128xf32>
    %c1_53 = arith.constant 1 : index
    %c0_54 = arith.constant 0 : index
    %c0_55 = arith.constant 0 : index
    %204 = vector.load %arg4[%c1_53, %c0_54, %c0_55] : memref<4x2x32xf32, #tpu.memory_space<vmem>>, vector<1x2x32xf32>
    %205 = vector.shape_cast %204 : vector<1x2x32xf32> to vector<2x32xf32>
    %c3 = arith.constant 3 : index
    %c0_56 = arith.constant 0 : index
    %c0_57 = arith.constant 0 : index
    %206 = vector.load %arg4[%c3, %c0_56, %c0_57] : memref<4x2x32xf32, #tpu.memory_space<vmem>>, vector<1x2x32xf32>
    %207 = vector.shape_cast %206 : vector<1x2x32xf32> to vector<2x32xf32>
    %c0_58 = arith.constant 0 : index
    %c0_59 = arith.constant 0 : index
    %208 = vector.load %arg8[%c0_58, %c0_59] : memref<16x32xbf16, #tpu.memory_space<vmem>>, vector<16x32xbf16>
    %cst_60 = arith.constant dense<0.000000e+00> : vector<16x128xf32>
    %209 = tpu.matmul %208, %201, %cst_60 {dimension_numbers = #tpu.dot_dimension_numbers<[1], [0], [0], [1], [0, 0, 1, 1], [], []>} : vector<16x32xbf16>, vector<32x128xbf16>, vector<16x128xf32> -> vector<16x128xf32>
    %210 = vector.broadcast %203 : vector<1x128xf32> to vector<16x128xf32>
    %211 = arith.addf %209, %210 : vector<16x128xf32>
    %212 = vector.extract_strided_slice %211 {offsets = [0, 0], sizes = [2, 128], strides = [1, 1]} : vector<16x128xf32> to vector<2x128xf32>
    %213 = arith.truncf %205 : vector<2x32xf32> to vector<2x32xbf16>
    %cst_61 = arith.constant dense<0.000000e+00> : vector<2x128xf32>
    %214 = tpu.matmul %213, %202, %cst_61 {dimension_numbers = #tpu.dot_dimension_numbers<[1], [0], [0], [1], [0, 0, 1, 1], [], []>} : vector<2x32xbf16>, vector<32x128xbf16>, vector<2x128xf32> -> vector<2x128xf32>
    %215 = arith.addf %212, %214 : vector<2x128xf32>
    %216 = arith.negf %215 : vector<2x128xf32>
    %217 = math.exp %216 : vector<2x128xf32>
    %cst_62 = arith.constant 1.000000e+00 : f32
    %218 = vector.broadcast %cst_62 : f32 to vector<2x128xf32>
    %219 = arith.addf %218, %217 : vector<2x128xf32>
    %220 = arith.divf %218, %219 : vector<2x128xf32>
    %221 = vector.extract_strided_slice %220 {offsets = [0, 0], sizes = [2, 32], strides = [1, 1]} : vector<2x128xf32> to vector<2x32xf32>
    %222 = vector.extract_strided_slice %220 {offsets = [0, 32], sizes = [2, 32], strides = [1, 1]} : vector<2x128xf32> to vector<2x32xf32>
    %223 = vector.extract_strided_slice %220 {offsets = [0, 64], sizes = [2, 32], strides = [1, 1]} : vector<2x128xf32> to vector<2x32xf32>
    %224 = vector.extract_strided_slice %215 {offsets = [0, 96], sizes = [2, 32], strides = [1, 1]} : vector<2x128xf32> to vector<2x32xf32>
    %225 = math.tanh %224 : vector<2x32xf32>
    %226 = arith.mulf %222, %207 : vector<2x32xf32>
    %227 = arith.mulf %221, %225 : vector<2x32xf32>
    %228 = arith.addf %226, %227 : vector<2x32xf32>
    %229 = math.tanh %228 : vector<2x32xf32>
    %230 = arith.mulf %223, %229 : vector<2x32xf32>
    %231 = vector.extract_strided_slice %211 {offsets = [2, 0], sizes = [2, 128], strides = [1, 1]} : vector<16x128xf32> to vector<2x128xf32>
    %232 = arith.truncf %230 : vector<2x32xf32> to vector<2x32xbf16>
    %cst_63 = arith.constant dense<0.000000e+00> : vector<2x128xf32>
    %233 = tpu.matmul %232, %202, %cst_63 {dimension_numbers = #tpu.dot_dimension_numbers<[1], [0], [0], [1], [0, 0, 1, 1], [], []>} : vector<2x32xbf16>, vector<32x128xbf16>, vector<2x128xf32> -> vector<2x128xf32>
    %234 = arith.addf %231, %233 : vector<2x128xf32>
    %235 = arith.negf %234 : vector<2x128xf32>
    %236 = math.exp %235 : vector<2x128xf32>
    %cst_64 = arith.constant 1.000000e+00 : f32
    %237 = vector.broadcast %cst_64 : f32 to vector<2x128xf32>
    %238 = arith.addf %237, %236 : vector<2x128xf32>
    %239 = arith.divf %237, %238 : vector<2x128xf32>
    %240 = vector.extract_strided_slice %239 {offsets = [0, 0], sizes = [2, 32], strides = [1, 1]} : vector<2x128xf32> to vector<2x32xf32>
    %241 = vector.extract_strided_slice %239 {offsets = [0, 32], sizes = [2, 32], strides = [1, 1]} : vector<2x128xf32> to vector<2x32xf32>
    %242 = vector.extract_strided_slice %239 {offsets = [0, 64], sizes = [2, 32], strides = [1, 1]} : vector<2x128xf32> to vector<2x32xf32>
    %243 = vector.extract_strided_slice %234 {offsets = [0, 96], sizes = [2, 32], strides = [1, 1]} : vector<2x128xf32> to vector<2x32xf32>
    %244 = math.tanh %243 : vector<2x32xf32>
    %245 = arith.mulf %241, %228 : vector<2x32xf32>
    %246 = arith.mulf %240, %244 : vector<2x32xf32>
    %247 = arith.addf %245, %246 : vector<2x32xf32>
    %248 = math.tanh %247 : vector<2x32xf32>
    %249 = arith.mulf %242, %248 : vector<2x32xf32>
    %250 = vector.extract_strided_slice %211 {offsets = [4, 0], sizes = [2, 128], strides = [1, 1]} : vector<16x128xf32> to vector<2x128xf32>
    %251 = arith.truncf %249 : vector<2x32xf32> to vector<2x32xbf16>
    %cst_65 = arith.constant dense<0.000000e+00> : vector<2x128xf32>
    %252 = tpu.matmul %251, %202, %cst_65 {dimension_numbers = #tpu.dot_dimension_numbers<[1], [0], [0], [1], [0, 0, 1, 1], [], []>} : vector<2x32xbf16>, vector<32x128xbf16>, vector<2x128xf32> -> vector<2x128xf32>
    %253 = arith.addf %250, %252 : vector<2x128xf32>
    %254 = arith.negf %253 : vector<2x128xf32>
    %255 = math.exp %254 : vector<2x128xf32>
    %cst_66 = arith.constant 1.000000e+00 : f32
    %256 = vector.broadcast %cst_66 : f32 to vector<2x128xf32>
    %257 = arith.addf %256, %255 : vector<2x128xf32>
    %258 = arith.divf %256, %257 : vector<2x128xf32>
    %259 = vector.extract_strided_slice %258 {offsets = [0, 0], sizes = [2, 32], strides = [1, 1]} : vector<2x128xf32> to vector<2x32xf32>
    %260 = vector.extract_strided_slice %258 {offsets = [0, 32], sizes = [2, 32], strides = [1, 1]} : vector<2x128xf32> to vector<2x32xf32>
    %261 = vector.extract_strided_slice %258 {offsets = [0, 64], sizes = [2, 32], strides = [1, 1]} : vector<2x128xf32> to vector<2x32xf32>
    %262 = vector.extract_strided_slice %253 {offsets = [0, 96], sizes = [2, 32], strides = [1, 1]} : vector<2x128xf32> to vector<2x32xf32>
    %263 = math.tanh %262 : vector<2x32xf32>
    %264 = arith.mulf %260, %247 : vector<2x32xf32>
    %265 = arith.mulf %259, %263 : vector<2x32xf32>
    %266 = arith.addf %264, %265 : vector<2x32xf32>
    %267 = math.tanh %266 : vector<2x32xf32>
    %268 = arith.mulf %261, %267 : vector<2x32xf32>
    %269 = vector.extract_strided_slice %211 {offsets = [6, 0], sizes = [2, 128], strides = [1, 1]} : vector<16x128xf32> to vector<2x128xf32>
    %270 = arith.truncf %268 : vector<2x32xf32> to vector<2x32xbf16>
    %cst_67 = arith.constant dense<0.000000e+00> : vector<2x128xf32>
    %271 = tpu.matmul %270, %202, %cst_67 {dimension_numbers = #tpu.dot_dimension_numbers<[1], [0], [0], [1], [0, 0, 1, 1], [], []>} : vector<2x32xbf16>, vector<32x128xbf16>, vector<2x128xf32> -> vector<2x128xf32>
    %272 = arith.addf %269, %271 : vector<2x128xf32>
    %273 = arith.negf %272 : vector<2x128xf32>
    %274 = math.exp %273 : vector<2x128xf32>
    %cst_68 = arith.constant 1.000000e+00 : f32
    %275 = vector.broadcast %cst_68 : f32 to vector<2x128xf32>
    %276 = arith.addf %275, %274 : vector<2x128xf32>
    %277 = arith.divf %275, %276 : vector<2x128xf32>
    %278 = vector.extract_strided_slice %277 {offsets = [0, 0], sizes = [2, 32], strides = [1, 1]} : vector<2x128xf32> to vector<2x32xf32>
    %279 = vector.extract_strided_slice %277 {offsets = [0, 32], sizes = [2, 32], strides = [1, 1]} : vector<2x128xf32> to vector<2x32xf32>
    %280 = vector.extract_strided_slice %277 {offsets = [0, 64], sizes = [2, 32], strides = [1, 1]} : vector<2x128xf32> to vector<2x32xf32>
    %281 = vector.extract_strided_slice %272 {offsets = [0, 96], sizes = [2, 32], strides = [1, 1]} : vector<2x128xf32> to vector<2x32xf32>
    %282 = math.tanh %281 : vector<2x32xf32>
    %283 = arith.mulf %279, %266 : vector<2x32xf32>
    %284 = arith.mulf %278, %282 : vector<2x32xf32>
    %285 = arith.addf %283, %284 : vector<2x32xf32>
    %286 = math.tanh %285 : vector<2x32xf32>
    %287 = arith.mulf %280, %286 : vector<2x32xf32>
    %288 = vector.extract_strided_slice %211 {offsets = [8, 0], sizes = [2, 128], strides = [1, 1]} : vector<16x128xf32> to vector<2x128xf32>
    %289 = arith.truncf %287 : vector<2x32xf32> to vector<2x32xbf16>
    %cst_69 = arith.constant dense<0.000000e+00> : vector<2x128xf32>
    %290 = tpu.matmul %289, %202, %cst_69 {dimension_numbers = #tpu.dot_dimension_numbers<[1], [0], [0], [1], [0, 0, 1, 1], [], []>} : vector<2x32xbf16>, vector<32x128xbf16>, vector<2x128xf32> -> vector<2x128xf32>
    %291 = arith.addf %288, %290 : vector<2x128xf32>
    %292 = arith.negf %291 : vector<2x128xf32>
    %293 = math.exp %292 : vector<2x128xf32>
    %cst_70 = arith.constant 1.000000e+00 : f32
    %294 = vector.broadcast %cst_70 : f32 to vector<2x128xf32>
    %295 = arith.addf %294, %293 : vector<2x128xf32>
    %296 = arith.divf %294, %295 : vector<2x128xf32>
    %297 = vector.extract_strided_slice %296 {offsets = [0, 0], sizes = [2, 32], strides = [1, 1]} : vector<2x128xf32> to vector<2x32xf32>
    %298 = vector.extract_strided_slice %296 {offsets = [0, 32], sizes = [2, 32], strides = [1, 1]} : vector<2x128xf32> to vector<2x32xf32>
    %299 = vector.extract_strided_slice %296 {offsets = [0, 64], sizes = [2, 32], strides = [1, 1]} : vector<2x128xf32> to vector<2x32xf32>
    %300 = vector.extract_strided_slice %291 {offsets = [0, 96], sizes = [2, 32], strides = [1, 1]} : vector<2x128xf32> to vector<2x32xf32>
    %301 = math.tanh %300 : vector<2x32xf32>
    %302 = arith.mulf %298, %285 : vector<2x32xf32>
    %303 = arith.mulf %297, %301 : vector<2x32xf32>
    %304 = arith.addf %302, %303 : vector<2x32xf32>
    %305 = math.tanh %304 : vector<2x32xf32>
    %306 = arith.mulf %299, %305 : vector<2x32xf32>
    %307 = vector.extract_strided_slice %211 {offsets = [10, 0], sizes = [2, 128], strides = [1, 1]} : vector<16x128xf32> to vector<2x128xf32>
    %308 = arith.truncf %306 : vector<2x32xf32> to vector<2x32xbf16>
    %cst_71 = arith.constant dense<0.000000e+00> : vector<2x128xf32>
    %309 = tpu.matmul %308, %202, %cst_71 {dimension_numbers = #tpu.dot_dimension_numbers<[1], [0], [0], [1], [0, 0, 1, 1], [], []>} : vector<2x32xbf16>, vector<32x128xbf16>, vector<2x128xf32> -> vector<2x128xf32>
    %310 = arith.addf %307, %309 : vector<2x128xf32>
    %311 = arith.negf %310 : vector<2x128xf32>
    %312 = math.exp %311 : vector<2x128xf32>
    %cst_72 = arith.constant 1.000000e+00 : f32
    %313 = vector.broadcast %cst_72 : f32 to vector<2x128xf32>
    %314 = arith.addf %313, %312 : vector<2x128xf32>
    %315 = arith.divf %313, %314 : vector<2x128xf32>
    %316 = vector.extract_strided_slice %315 {offsets = [0, 0], sizes = [2, 32], strides = [1, 1]} : vector<2x128xf32> to vector<2x32xf32>
    %317 = vector.extract_strided_slice %315 {offsets = [0, 32], sizes = [2, 32], strides = [1, 1]} : vector<2x128xf32> to vector<2x32xf32>
    %318 = vector.extract_strided_slice %315 {offsets = [0, 64], sizes = [2, 32], strides = [1, 1]} : vector<2x128xf32> to vector<2x32xf32>
    %319 = vector.extract_strided_slice %310 {offsets = [0, 96], sizes = [2, 32], strides = [1, 1]} : vector<2x128xf32> to vector<2x32xf32>
    %320 = math.tanh %319 : vector<2x32xf32>
    %321 = arith.mulf %317, %304 : vector<2x32xf32>
    %322 = arith.mulf %316, %320 : vector<2x32xf32>
    %323 = arith.addf %321, %322 : vector<2x32xf32>
    %324 = math.tanh %323 : vector<2x32xf32>
    %325 = arith.mulf %318, %324 : vector<2x32xf32>
    %326 = vector.extract_strided_slice %211 {offsets = [12, 0], sizes = [2, 128], strides = [1, 1]} : vector<16x128xf32> to vector<2x128xf32>
    %327 = arith.truncf %325 : vector<2x32xf32> to vector<2x32xbf16>
    %cst_73 = arith.constant dense<0.000000e+00> : vector<2x128xf32>
    %328 = tpu.matmul %327, %202, %cst_73 {dimension_numbers = #tpu.dot_dimension_numbers<[1], [0], [0], [1], [0, 0, 1, 1], [], []>} : vector<2x32xbf16>, vector<32x128xbf16>, vector<2x128xf32> -> vector<2x128xf32>
    %329 = arith.addf %326, %328 : vector<2x128xf32>
    %330 = arith.negf %329 : vector<2x128xf32>
    %331 = math.exp %330 : vector<2x128xf32>
    %cst_74 = arith.constant 1.000000e+00 : f32
    %332 = vector.broadcast %cst_74 : f32 to vector<2x128xf32>
    %333 = arith.addf %332, %331 : vector<2x128xf32>
    %334 = arith.divf %332, %333 : vector<2x128xf32>
    %335 = vector.extract_strided_slice %334 {offsets = [0, 0], sizes = [2, 32], strides = [1, 1]} : vector<2x128xf32> to vector<2x32xf32>
    %336 = vector.extract_strided_slice %334 {offsets = [0, 32], sizes = [2, 32], strides = [1, 1]} : vector<2x128xf32> to vector<2x32xf32>
    %337 = vector.extract_strided_slice %334 {offsets = [0, 64], sizes = [2, 32], strides = [1, 1]} : vector<2x128xf32> to vector<2x32xf32>
    %338 = vector.extract_strided_slice %329 {offsets = [0, 96], sizes = [2, 32], strides = [1, 1]} : vector<2x128xf32> to vector<2x32xf32>
    %339 = math.tanh %338 : vector<2x32xf32>
    %340 = arith.mulf %336, %323 : vector<2x32xf32>
    %341 = arith.mulf %335, %339 : vector<2x32xf32>
    %342 = arith.addf %340, %341 : vector<2x32xf32>
    %343 = math.tanh %342 : vector<2x32xf32>
    %344 = arith.mulf %337, %343 : vector<2x32xf32>
    %345 = vector.extract_strided_slice %211 {offsets = [14, 0], sizes = [2, 128], strides = [1, 1]} : vector<16x128xf32> to vector<2x128xf32>
    %346 = arith.truncf %344 : vector<2x32xf32> to vector<2x32xbf16>
    %cst_75 = arith.constant dense<0.000000e+00> : vector<2x128xf32>
    %347 = tpu.matmul %346, %202, %cst_75 {dimension_numbers = #tpu.dot_dimension_numbers<[1], [0], [0], [1], [0, 0, 1, 1], [], []>} : vector<2x32xbf16>, vector<32x128xbf16>, vector<2x128xf32> -> vector<2x128xf32>
    %348 = arith.addf %345, %347 : vector<2x128xf32>
    %349 = arith.negf %348 : vector<2x128xf32>
    %350 = math.exp %349 : vector<2x128xf32>
    %cst_76 = arith.constant 1.000000e+00 : f32
    %351 = vector.broadcast %cst_76 : f32 to vector<2x128xf32>
    %352 = arith.addf %351, %350 : vector<2x128xf32>
    %353 = arith.divf %351, %352 : vector<2x128xf32>
    %354 = vector.extract_strided_slice %353 {offsets = [0, 0], sizes = [2, 32], strides = [1, 1]} : vector<2x128xf32> to vector<2x32xf32>
    %355 = vector.extract_strided_slice %353 {offsets = [0, 32], sizes = [2, 32], strides = [1, 1]} : vector<2x128xf32> to vector<2x32xf32>
    %356 = vector.extract_strided_slice %353 {offsets = [0, 64], sizes = [2, 32], strides = [1, 1]} : vector<2x128xf32> to vector<2x32xf32>
    %357 = vector.extract_strided_slice %348 {offsets = [0, 96], sizes = [2, 32], strides = [1, 1]} : vector<2x128xf32> to vector<2x32xf32>
    %358 = math.tanh %357 : vector<2x32xf32>
    %359 = arith.mulf %355, %342 : vector<2x32xf32>
    %360 = arith.mulf %354, %358 : vector<2x32xf32>
    %361 = arith.addf %359, %360 : vector<2x32xf32>
    %362 = math.tanh %361 : vector<2x32xf32>
    %363 = arith.mulf %356, %362 : vector<2x32xf32>
    %c1_77 = arith.constant 1 : index
    %c0_78 = arith.constant 0 : index
    %c0_79 = arith.constant 0 : index
    %364 = vector.load %arg7[%c1_77, %c0_78, %c0_79] : memref<4x2x32xf32, #tpu.memory_space<vmem>>, vector<1x2x32xf32>
    %365 = vector.shape_cast %364 : vector<1x2x32xf32> to vector<2x32xf32>
    %366 = vector.shape_cast %363 : vector<2x32xf32> to vector<1x2x32xf32>
    tpu.vector_store %arg7[%c1_77, %c0_78, %c0_79], %366 {strides = array<i32>} : memref<4x2x32xf32, #tpu.memory_space<vmem>>, vector<1x2x32xf32>,
    %c3_80 = arith.constant 3 : index
    %c0_81 = arith.constant 0 : index
    %c0_82 = arith.constant 0 : index
    %367 = vector.load %arg7[%c3_80, %c0_81, %c0_82] : memref<4x2x32xf32, #tpu.memory_space<vmem>>, vector<1x2x32xf32>
    %368 = vector.shape_cast %367 : vector<1x2x32xf32> to vector<2x32xf32>
    %369 = vector.shape_cast %361 : vector<2x32xf32> to vector<1x2x32xf32>
    tpu.vector_store %arg7[%c3_80, %c0_81, %c0_82], %369 {strides = array<i32>} : memref<4x2x32xf32, #tpu.memory_space<vmem>>, vector<1x2x32xf32>,
    %370 = arith.truncf %363 : vector<2x32xf32> to vector<2x32xbf16>
    %c0_83 = arith.constant 0 : index
    %c0_84 = arith.constant 0 : index
    %371 = vector.load %arg5[%c0_83, %c0_84] : memref<32x3xbf16, #tpu.memory_space<vmem>>, vector<32x3xbf16>
    %cst_85 = arith.constant dense<0.000000e+00> : vector<2x3xf32>
    %372 = tpu.matmul %370, %371, %cst_85 {dimension_numbers = #tpu.dot_dimension_numbers<[1], [0], [0], [1], [0, 0, 1, 1], [], []>} : vector<2x32xbf16>, vector<32x3xbf16>, vector<2x3xf32> -> vector<2x3xf32>
    %373 = vector.broadcast %2 : vector<1x3xf32> to vector<2x3xf32>
    %374 = arith.addf %372, %373 : vector<2x3xf32>
    %c0_86 = arith.constant 0 : index
    %c0_87 = arith.constant 0 : index
    %375 = vector.load %arg6[%c0_86, %c0_87] : memref<2x3xf32, #tpu.memory_space<vmem>>, vector<2x3xf32>
    tpu.vector_store %arg6[%c0_86, %c0_87], %374 {strides = array<i32>} : memref<2x3xf32, #tpu.memory_space<vmem>>, vector<2x3xf32>,
    return
  }
}

</mosaic_0001>

<llo_original>
// kernel: compatible_lstm_predictor.1
$region0: #{compatible_lstm_predictor.1}
  #allocation0 [shape = 'u32[]', space=smem, size = 0x4, offset = 0x4, fixed_abs, tag = 'smem constant byte address 0x4 - core index']
  #allocation1 [shape = 'u32[144,128]{1,0:T(1,128)}', space=vmem, size = 0x12000, scoped, tag = 'internal scratch']
  #allocation2 [shape = 'bf16[16,32]{1,0:T(16,128)(2,1)}', space=vmem, size = 0x1000, scoped, tag = 'scratch operand']
  %s0 = inlined_call_operand.vmem [shape: bf16[16,4], index: 0, kind: input, shape index: {}]
  %s1 = inlined_call_operand.vmem [shape: bf16[4,32], index: 1, kind: input, shape index: {}]
  %s2 = inlined_call_operand.vmem [shape: bf16[2,32,256], index: 2, kind: input, shape index: {}]
  %s3 = inlined_call_operand.vmem [shape: f32[4,128], index: 3, kind: input, shape index: {}]
  %s4 = inlined_call_operand.vmem [shape: f32[4,2,32], index: 4, kind: input, shape index: {}, may-alias: {4,7}]
  %s5 = inlined_call_operand.vmem [shape: bf16[32,3], index: 5, kind: input, shape index: {}]
  %s6 = inlined_call_operand.hbm [shape: f32[2,3], index: 6, kind: output, shape index: {0}]
  %s7 = inlined_call_operand.vmem [shape: f32[4,2,32], index: 7, kind: output, shape index: {1}, may-alias: {4,7}]
  %8 = xla_tuple %s6, %s7
  %s9 = sld [smem:[#allocation0]]
  $region42: #{compatible_lstm_predictor.1} parent=0
    _
  %s11 = ssub.s32 1, %s9
  %s12 = scalar_select 0, %s11, %s9
  $region1: #{compatible_lstm_predictor.1} parent=0
    #allocation3 [shape = 'u8[1024]{0}', space=vmem, size = 0x400, scoped, tag = 'output window, operand 0, single buffered']
    #allocation4 [shape = 's32[1]{0}', space=sflag, size = 0x4, scoped, tag = 'scoped memory for compatible_lstm_predictor.1']
    %13 = vsyncpa [#allocation4], 0
    // Predicated region
    $region2: #{compatible_lstm_predictor.1} parent=1 // pred_check
      _
    $region3: #{compatible_lstm_predictor.1} parent=1 // pred_check_branch
      %15 = sbr.rel (0) target = $region5
    $region4: #{compatible_lstm_predictor.1} parent=1 // pred_region
      _
    $region5: #{compatible_lstm_predictor.1} parent=1 // pred_fallthru
      _
    // Predicated region
    $region6: #{compatible_lstm_predictor.1} parent=1 // pred_check
      _
    $region7: #{compatible_lstm_predictor.1} parent=1 // pred_check_branch
      %17 = sbr.rel (0) target = $region9
    $region8: #{compatible_lstm_predictor.1} parent=1 // pred_region
      _
    $region9: #{compatible_lstm_predictor.1} parent=1 // pred_fallthru
      _
    // Predicated region
    $region10: #{compatible_lstm_predictor.1} parent=1 // pred_check
      _
    $region11: #{compatible_lstm_predictor.1} parent=1 // pred_check_branch
      %19 = sbr.rel (0) target = $region13
    $region12: #{compatible_lstm_predictor.1} parent=1 // pred_region
      _
    $region13: #{compatible_lstm_predictor.1} parent=1 // pred_fallthru
      _
    // Predicated region
    $region14: #{compatible_lstm_predictor.1} parent=1 // pred_check
      _
    $region15: #{compatible_lstm_predictor.1} parent=1 // pred_check_branch
      %21 = sbr.rel (0) target = $region17
    $region16: #{compatible_lstm_predictor.1} parent=1 // pred_region
      _
    $region17: #{compatible_lstm_predictor.1} parent=1 // pred_fallthru
      _
    // Predicated region
    $region18: #{compatible_lstm_predictor.1} parent=1 // pred_check
      _
    $region19: #{compatible_lstm_predictor.1} parent=1 // pred_check_branch
      %23 = sbr.rel (0) target = $region21
    $region20: #{compatible_lstm_predictor.1} parent=1 // pred_region
      _
    $region21: #{compatible_lstm_predictor.1} parent=1 // pred_fallthru
      _
    // Predicated region
    $region22: #{compatible_lstm_predictor.1} parent=1 // pred_check
      _
    $region23: #{compatible_lstm_predictor.1} parent=1 // pred_check_branch
      %25 = sbr.rel (0) target = $region25
    $region24: #{compatible_lstm_predictor.1} parent=1 // pred_region
      _
    $region25: #{compatible_lstm_predictor.1} parent=1 // pred_fallthru
      _
    %v27 = vld [vmem:[%s3] sm:$0xf]
    %v28 = vld [vmem:[%s0] sm:$0xf]
    %v29 = vld [vmem:[%s0 + $0x4] sm:$0xf]
    %v30 = vld [vmem:[%s1] sm:$0x3]
    %v31 = vlaneseq
    %v32 = vshrl.u32 %v31, 7
    %v33 = vsub.s32 2, %v32
    %v34 = vrot.slane %v27, %v33
    %v37 = vunpack.c.l.b16 %v28
    %v38 = vunpack.c.l.b16 %v29
    %v39 = vpack.c.b16 %v38, %v37
    %vm40 = vcmask 31744
    %v42 = vsel %vm40, %v39, 0
    %vm44 = vcmask 1041408
    %v46 = vsel %vm44, %v30, 0
    %48 = vmatprep.subr.bf16.mxu0 0
    %49 = vmatpush1.bf16.msra.mxu0 %v46
    %50 = vmatprep.subr.bf16.mxu0 0
    %51 = vmatpush1.bf16.msra.mxu0 0
    %52 = vmatprep.subr.bf16.mxu0 0
    %53 = vmatpush1.bf16.msra.mxu0 0
    %54 = vmatprep.subr.bf16.mxu0 0
    %55 = vmatpush1.bf16.msra.mxu0 0
    %56 = vmatprep.subr.bf16.mxu0 0
    %57 = vmatpush1.bf16.msra.mxu0 0
    %58 = vmatprep.subr.bf16.mxu0 0
    %59 = vmatpush1.bf16.msra.mxu0 0
    %60 = vmatprep.subr.bf16.mxu0 0
    %61 = vmatpush1.bf16.msra.mxu0 0
    %62 = vmatprep.subr.bf16.mxu0 0
    %63 = vmatpush1.bf16.msra.mxu0 0
    %64 = vmatprep.subr.bf16.mxu0 0
    %65 = vmatpush1.bf16.msra.mxu0 0
    %66 = vmatprep.subr.bf16.mxu0 0
    %67 = vmatpush1.bf16.msra.mxu0 0
    %68 = vmatprep.subr.bf16.mxu0 0
    %69 = vmatpush1.bf16.msra.mxu0 0
    %70 = vmatprep.subr.bf16.mxu0 0
    %71 = vmatpush1.bf16.msra.mxu0 0
    %72 = vmatprep.subr.bf16.mxu0 0
    %73 = vmatpush1.bf16.msra.mxu0 0
    %74 = vmatprep.subr.bf16.mxu0 0
    %75 = vmatpush1.bf16.msra.mxu0 0
    %76 = vmatprep.subr.bf16.mxu0 0
    %77 = vmatpush1.bf16.msra.mxu0 0
    %78 = vmatprep.subr.bf16.mxu0 0
    %79 = vmatpush1.bf16.msra.mxu0 0
    %80 = vmatprep.mubr.bf16.mxu0 0
    %81 = vmatmul.mubr.bf16.gmra.mrb[0].mxu0 %v42
    %v82 = vpop.f32.mrb[0].mxu0
    %v83 = vadd.f32 %v34, %v82
    %v84 = vpop.f32.mrb[0].mxu0
    %v85 = vpop.f32.mrb[0].mxu0
    %v86 = vadd.f32 %v34, %v85
    %v87 = vpop.f32.mrb[0].mxu0
    %88 = vdwg.mxu0
    %v89 = vmax.f32 %v83, 0.0
    %v90 = vmax.f32 %v86, 0.0
    %v91 = vpack.c.bf16 %v90, %v89
    %vm92 = vcmask 261120
    %93 = vst.msk [vmem:[#allocation2] sm:$0xff] %vm92, %v91
    %v94 = vld [vmem:[%s2] sm:$0xff]
    %v95 = vld [vmem:[%s2 + $0x8] sm:$0xff]
    %v96 = vld [vmem:[%s2 + $0x10] sm:$0xff]
    %v97 = vld [vmem:[%s2 + $0x18] sm:$0xff]
    %v98 = vld [vmem:[%s4] sm:$0x3]
    %s99 = scalar_lea.vmem %s4, 4
    %v100 = vld [vmem:[%s99] sm:$0x3]
    %v101 = vld [vmem:[#allocation2] sm:$0xff]
    %v102 = vlaneseq
    %v103 = vshrl.u32 %v102, 7
    %v104 = vsub.s32 0, %v103
    %v105 = vrot.slane %v27, %v104
    %v110 = vunpack.c.l.b16 %v94
    %v111 = vunpack.c.l.b16 %v95
    %v112 = vunpack.c.l.b16 %v96
    %v113 = vunpack.c.l.b16 %v97
    %v114 = vpack.c.b16 %v111, %v110
    %v115 = vpack.c.b16 %v113, %v112
    %v119 = vsel %vm92, %v101, 0
    %121 = vmatprep.subr.bf16.mxu0 0
    %122 = vmatpush1.bf16.msra.mxu0 %v114
    %123 = vmatprep.subr.bf16.mxu0 0
    %124 = vmatpush1.bf16.msra.mxu0 %v115
    %125 = vmatprep.subr.bf16.mxu0 0
    %126 = vmatpush1.bf16.msra.mxu0 0
    %127 = vmatprep.subr.bf16.mxu0 0
    %128 = vmatpush1.bf16.msra.mxu0 0
    %129 = vmatprep.subr.bf16.mxu0 0
    %130 = vmatpush1.bf16.msra.mxu0 0
    %131 = vmatprep.subr.bf16.mxu0 0
    %132 = vmatpush1.bf16.msra.mxu0 0
    %133 = vmatprep.subr.bf16.mxu0 0
    %134 = vmatpush1.bf16.msra.mxu0 0
    %135 = vmatprep.subr.bf16.mxu0 0
    %136 = vmatpush1.bf16.msra.mxu0 0
    %137 = vmatprep.subr.bf16.mxu0 0
    %138 = vmatpush1.bf16.msra.mxu0 0
    %139 = vmatprep.subr.bf16.mxu0 0
    %140 = vmatpush1.bf16.msra.mxu0 0
    %141 = vmatprep.subr.bf16.mxu0 0
    %142 = vmatpush1.bf16.msra.mxu0 0
    %143 = vmatprep.subr.bf16.mxu0 0
    %144 = vmatpush1.bf16.msra.mxu0 0
    %145 = vmatprep.subr.bf16.mxu0 0
    %146 = vmatpush1.bf16.msra.mxu0 0
    %147 = vmatprep.subr.bf16.mxu0 0
    %148 = vmatpush1.bf16.msra.mxu0 0
    %149 = vmatprep.subr.bf16.mxu0 0
    %150 = vmatpush1.bf16.msra.mxu0 0
    %151 = vmatprep.subr.bf16.mxu0 0
    %152 = vmatpush1.bf16.msra.mxu0 0
    %153 = vmatprep.mubr.bf16.mxu0 0
    %154 = vmatmul.mubr.bf16.gmra.mrb[0].mxu0 %v119
    %v155 = vpop.f32.mrb[0].mxu0
    %v156 = vadd.f32 %v105, %v155
    %v157 = vpop.f32.mrb[0].mxu0
    %v158 = vpop.f32.mrb[0].mxu0
    %v159 = vadd.f32 %v105, %v158
    %v160 = vpop.f32.mrb[0].mxu0
    %161 = vdwg.mxu0
    %v162 = vpack.c.bf16 %v98, %v98
    %v163 = vunpack.c.h.b16 %v94
    %v164 = vunpack.c.h.b16 %v95
    %v165 = vunpack.c.h.b16 %v96
    %v166 = vunpack.c.h.b16 %v97
    %v167 = vpack.c.b16 %v164, %v163
    %v168 = vpack.c.b16 %v166, %v165
    %v172 = vsel %vm92, %v162, 0
    %174 = vmatprep.subr.bf16.mxu0 0
    %175 = vmatpush1.bf16.msra.mxu0 %v167
    %176 = vmatprep.subr.bf16.mxu0 0
    %177 = vmatpush1.bf16.msra.mxu0 %v168
    %178 = vmatprep.subr.bf16.mxu0 0
    %179 = vmatpush1.bf16.msra.mxu0 0
    %180 = vmatprep.subr.bf16.mxu0 0
    %181 = vmatpush1.bf16.msra.mxu0 0
    %182 = vmatprep.subr.bf16.mxu0 0
    %183 = vmatpush1.bf16.msra.mxu0 0
    %184 = vmatprep.subr.bf16.mxu0 0
    %185 = vmatpush1.bf16.msra.mxu0 0
    %186 = vmatprep.subr.bf16.mxu0 0
    %187 = vmatpush1.bf16.msra.mxu0 0
    %188 = vmatprep.subr.bf16.mxu0 0
    %189 = vmatpush1.bf16.msra.mxu0 0
    %190 = vmatprep.subr.bf16.mxu0 0
    %191 = vmatpush1.bf16.msra.mxu0 0
    %192 = vmatprep.subr.bf16.mxu0 0
    %193 = vmatpush1.bf16.msra.mxu0 0
    %194 = vmatprep.subr.bf16.mxu0 0
    %195 = vmatpush1.bf16.msra.mxu0 0
    %196 = vmatprep.subr.bf16.mxu0 0
    %197 = vmatpush1.bf16.msra.mxu0 0
    %198 = vmatprep.subr.bf16.mxu0 0
    %199 = vmatpush1.bf16.msra.mxu0 0
    %200 = vmatprep.subr.bf16.mxu0 0
    %201 = vmatpush1.bf16.msra.mxu0 0
    %202 = vmatprep.subr.bf16.mxu0 0
    %203 = vmatpush1.bf16.msra.mxu0 0
    %204 = vmatprep.subr.bf16.mxu0 0
    %205 = vmatpush1.bf16.msra.mxu0 0
    %206 = vmatprep.mubr.bf16.mxu0 0
    %207 = vmatmul.mubr.bf16.gmra.mrb[0].mxu0 %v172
    %v208 = vpop.f32.mrb[0].mxu0
    %v209 = vadd.f32 0.0, %v208
    %v210 = vpop.f32.mrb[0].mxu0
    %v211 = vpop.f32.mrb[0].mxu0
    %v212 = vpop.f32.mrb[0].mxu0
    %213 = vdwg.mxu0
    %v214 = vadd.f32 %v156, %v209
    %v215 = vxor.u32 %v214, 2147483648
    %v216 = vmul.f32 %v215, 1.442695
    %v217 = vpow.pop %v216
    %v218 = vadd.f32 %v217, 1.0
    %v219 = vrcp.pop %v218
    %v220 = vmul.f32 1.0, %v219
    %v221 = vtanh.pop %v214
    %223 = vrot.lane.b32.xlu0 %v100, 32
    %v224 = vpop.permute.xlu0 %223
    %v226 = vmul.f32 %v220, %v224
    %228 = vrot.lane.b32.xlu0 %v221, 32
    %v229 = vpop.permute.xlu0 %228
    %v231 = vmul.f32 %v220, %v229
    %233 = vrot.lane.b32.xlu0 %v231, 32
    %v234 = vpop.permute.xlu0 %233
    %v236 = vadd.f32 %v226, %v234
    %v237 = vtanh.pop %v236
    %239 = vrot.lane.b32.xlu0 %v237, 32
    %v240 = vpop.permute.xlu0 %239
    %v242 = vmul.f32 %v220, %v240
    %v243 = vpack.c.bf16 %v242, %v242
    %245 = vrot.lane.b32.xlu0 %v243, 64
    %v246 = vpop.permute.xlu0 %245
    %vm248 = vcmask 253952
    %249 = vst.msk [vmem:[#allocation2] sm:$0x1] %vm248, %v246
    %v251 = vsel %vm92, %v246, 0
    %253 = vmatprep.subr.bf16.mxu0 0
    %254 = vmatpush1.bf16.msra.mxu0 %v167
    %255 = vmatprep.subr.bf16.mxu0 0
    %256 = vmatpush1.bf16.msra.mxu0 %v168
    %257 = vmatprep.subr.bf16.mxu0 0
    %258 = vmatpush1.bf16.msra.mxu0 0
    %259 = vmatprep.subr.bf16.mxu0 0
    %260 = vmatpush1.bf16.msra.mxu0 0
    %261 = vmatprep.subr.bf16.mxu0 0
    %262 = vmatpush1.bf16.msra.mxu0 0
    %263 = vmatprep.subr.bf16.mxu0 0
    %264 = vmatpush1.bf16.msra.mxu0 0
    %265 = vmatprep.subr.bf16.mxu0 0
    %266 = vmatpush1.bf16.msra.mxu0 0
    %267 = vmatprep.subr.bf16.mxu0 0
    %268 = vmatpush1.bf16.msra.mxu0 0
    %269 = vmatprep.subr.bf16.mxu0 0
    %270 = vmatpush1.bf16.msra.mxu0 0
    %271 = vmatprep.subr.bf16.mxu0 0
    %272 = vmatpush1.bf16.msra.mxu0 0
    %273 = vmatprep.subr.bf16.mxu0 0
    %274 = vmatpush1.bf16.msra.mxu0 0
    %275 = vmatprep.subr.bf16.mxu0 0
    %276 = vmatpush1.bf16.msra.mxu0 0
    %277 = vmatprep.subr.bf16.mxu0 0
    %278 = vmatpush1.bf16.msra.mxu0 0
    %279 = vmatprep.subr.bf16.mxu0 0
    %280 = vmatpush1.bf16.msra.mxu0 0
    %281 = vmatprep.subr.bf16.mxu0 0
    %282 = vmatpush1.bf16.msra.mxu0 0
    %283 = vmatprep.subr.bf16.mxu0 0
    %284 = vmatpush1.bf16.msra.mxu0 0
    %285 = vmatprep.mubr.bf16.mxu0 0
    %286 = vmatmul.mubr.bf16.gmra.mrb[0].mxu0 %v251
    %v287 = vpop.f32.mrb[0].mxu0
    %v288 = vadd.f32 0.0, %v287
    %v289 = vpop.f32.mrb[0].mxu0
    %v290 = vpop.f32.mrb[0].mxu0
    %v291 = vpop.f32.mrb[0].mxu0
    %292 = vdwg.mxu0
    %v294 = vrot.slane %v288, 6
    %v296 = vadd.f32 %v156, %v294
    %v297 = vxor.u32 %v296, 2147483648
    %v298 = vmul.f32 %v297, 1.442695
    %v299 = vpow.pop %v298
    %v300 = vadd.f32 %v299, 1.0
    %v301 = vrcp.pop %v300
    %v302 = vmul.f32 1.0, %v301
    %v303 = vtanh.pop %v296
    %v305 = vrot.slane %v236, 6
    %v307 = vmul.f32 %v302, %v305
    %309 = vrot.lane.b32.xlu0 %v303, 32
    %v310 = vpop.permute.xlu0 %309
    %v312 = vmul.f32 %v302, %v310
    %314 = vrot.lane.b32.xlu0 %v312, 32
    %v315 = vpop.permute.xlu0 %314
    %v317 = vadd.f32 %v307, %v315
    %v318 = vtanh.pop %v317
    %320 = vrot.lane.b32.xlu0 %v318, 32
    %v321 = vpop.permute.xlu0 %320
    %v323 = vmul.f32 %v302, %v321
    %v324 = vpack.c.bf16 %v323, %v323
    %326 = vrot.lane.b32.xlu0 %v324, 64
    %v327 = vpop.permute.xlu0 %326
    %vm329 = vcmask 254977
    %330 = vst.msk [vmem:[#allocation2] sm:$0x2] %vm329, %v327
    %v331 = vrot.slane %v324, 1
    %332 = vrot.lane.b32.xlu0 %v331, 64
    %v333 = vpop.permute.xlu0 %332
    %v335 = vsel %vm92, %v333, 0
    %337 = vmatprep.subr.bf16.mxu0 0
    %338 = vmatpush1.bf16.msra.mxu0 %v167
    %339 = vmatprep.subr.bf16.mxu0 0
    %340 = vmatpush1.bf16.msra.mxu0 %v168
    %341 = vmatprep.subr.bf16.mxu0 0
    %342 = vmatpush1.bf16.msra.mxu0 0
    %343 = vmatprep.subr.bf16.mxu0 0
    %344 = vmatpush1.bf16.msra.mxu0 0
    %345 = vmatprep.subr.bf16.mxu0 0
    %346 = vmatpush1.bf16.msra.mxu0 0
    %347 = vmatprep.subr.bf16.mxu0 0
    %348 = vmatpush1.bf16.msra.mxu0 0
    %349 = vmatprep.subr.bf16.mxu0 0
    %350 = vmatpush1.bf16.msra.mxu0 0
    %351 = vmatprep.subr.bf16.mxu0 0
    %352 = vmatpush1.bf16.msra.mxu0 0
    %353 = vmatprep.subr.bf16.mxu0 0
    %354 = vmatpush1.bf16.msra.mxu0 0
    %355 = vmatprep.subr.bf16.mxu0 0
    %356 = vmatpush1.bf16.msra.mxu0 0
    %357 = vmatprep.subr.bf16.mxu0 0
    %358 = vmatpush1.bf16.msra.mxu0 0
    %359 = vmatprep.subr.bf16.mxu0 0
    %360 = vmatpush1.bf16.msra.mxu0 0
    %361 = vmatprep.subr.bf16.mxu0 0
    %362 = vmatpush1.bf16.msra.mxu0 0
    %363 = vmatprep.subr.bf16.mxu0 0
    %364 = vmatpush1.bf16.msra.mxu0 0
    %365 = vmatprep.subr.bf16.mxu0 0
    %366 = vmatpush1.bf16.msra.mxu0 0
    %367 = vmatprep.subr.bf16.mxu0 0
    %368 = vmatpush1.bf16.msra.mxu0 0
    %369 = vmatprep.mubr.bf16.mxu0 0
    %370 = vmatmul.mubr.bf16.gmra.mrb[0].mxu0 %v335
    %v371 = vpop.f32.mrb[0].mxu0
    %v372 = vadd.f32 0.0, %v371
    %v373 = vpop.f32.mrb[0].mxu0
    %v374 = vpop.f32.mrb[0].mxu0
    %v375 = vpop.f32.mrb[0].mxu0
    %376 = vdwg.mxu0
    %v378 = vrot.slane %v372, 4
    %v380 = vadd.f32 %v156, %v378
    %v381 = vxor.u32 %v380, 2147483648
    %v382 = vmul.f32 %v381, 1.442695
    %v383 = vpow.pop %v382
    %v384 = vadd.f32 %v383, 1.0
    %v385 = vrcp.pop %v384
    %v386 = vmul.f32 1.0, %v385
    %v387 = vtanh.pop %v380
    %v389 = vrot.slane %v317, 6
    %v391 = vmul.f32 %v386, %v389
    %393 = vrot.lane.b32.xlu0 %v387, 32
    %v394 = vpop.permute.xlu0 %393
    %v396 = vmul.f32 %v386, %v394
    %398 = vrot.lane.b32.xlu0 %v396, 32
    %v399 = vpop.permute.xlu0 %398
    %v401 = vadd.f32 %v391, %v399
    %v402 = vtanh.pop %v401
    %404 = vrot.lane.b32.xlu0 %v402, 32
    %v405 = vpop.permute.xlu0 %404
    %v407 = vmul.f32 %v386, %v405
    %v408 = vpack.c.bf16 %v407, %v407
    %410 = vrot.lane.b32.xlu0 %v408, 64
    %v411 = vpop.permute.xlu0 %410
    %vm413 = vcmask 256002
    %414 = vst.msk [vmem:[#allocation2] sm:$0x4] %vm413, %v411
    %v415 = vrot.slane %v408, 2
    %416 = vrot.lane.b32.xlu0 %v415, 64
    %v417 = vpop.permute.xlu0 %416
    %v419 = vsel %vm92, %v417, 0
    %421 = vmatprep.subr.bf16.mxu0 0
    %422 = vmatpush1.bf16.msra.mxu0 %v167
    %423 = vmatprep.subr.bf16.mxu0 0
    %424 = vmatpush1.bf16.msra.mxu0 %v168
    %425 = vmatprep.subr.bf16.mxu0 0
    %426 = vmatpush1.bf16.msra.mxu0 0
    %427 = vmatprep.subr.bf16.mxu0 0
    %428 = vmatpush1.bf16.msra.mxu0 0
    %429 = vmatprep.subr.bf16.mxu0 0
    %430 = vmatpush1.bf16.msra.mxu0 0
    %431 = vmatprep.subr.bf16.mxu0 0
    %432 = vmatpush1.bf16.msra.mxu0 0
    %433 = vmatprep.subr.bf16.mxu0 0
    %434 = vmatpush1.bf16.msra.mxu0 0
    %435 = vmatprep.subr.bf16.mxu0 0
    %436 = vmatpush1.bf16.msra.mxu0 0
    %437 = vmatprep.subr.bf16.mxu0 0
    %438 = vmatpush1.bf16.msra.mxu0 0
    %439 = vmatprep.subr.bf16.mxu0 0
    %440 = vmatpush1.bf16.msra.mxu0 0
    %441 = vmatprep.subr.bf16.mxu0 0
    %442 = vmatpush1.bf16.msra.mxu0 0
    %443 = vmatprep.subr.bf16.mxu0 0
    %444 = vmatpush1.bf16.msra.mxu0 0
    %445 = vmatprep.subr.bf16.mxu0 0
    %446 = vmatpush1.bf16.msra.mxu0 0
    %447 = vmatprep.subr.bf16.mxu0 0
    %448 = vmatpush1.bf16.msra.mxu0 0
    %449 = vmatprep.subr.bf16.mxu0 0
    %450 = vmatpush1.bf16.msra.mxu0 0
    %451 = vmatprep.subr.bf16.mxu0 0
    %452 = vmatpush1.bf16.msra.mxu0 0
    %453 = vmatprep.mubr.bf16.mxu0 0
    %454 = vmatmul.mubr.bf16.gmra.mrb[0].mxu0 %v419
    %v455 = vpop.f32.mrb[0].mxu0
    %v456 = vadd.f32 0.0, %v455
    %v457 = vpop.f32.mrb[0].mxu0
    %v458 = vpop.f32.mrb[0].mxu0
    %v459 = vpop.f32.mrb[0].mxu0
    %460 = vdwg.mxu0
    %v462 = vrot.slane %v456, 2
    %v464 = vadd.f32 %v156, %v462
    %v465 = vxor.u32 %v464, 2147483648
    %v466 = vmul.f32 %v465, 1.442695
    %v467 = vpow.pop %v466
    %v468 = vadd.f32 %v467, 1.0
    %v469 = vrcp.pop %v468
    %v470 = vmul.f32 1.0, %v469
    %v471 = vtanh.pop %v464
    %v473 = vrot.slane %v401, 6
    %v475 = vmul.f32 %v470, %v473
    %477 = vrot.lane.b32.xlu0 %v471, 32
    %v478 = vpop.permute.xlu0 %477
    %v480 = vmul.f32 %v470, %v478
    %482 = vrot.lane.b32.xlu0 %v480, 32
    %v483 = vpop.permute.xlu0 %482
    %v485 = vadd.f32 %v475, %v483
    %v486 = vtanh.pop %v485
    %488 = vrot.lane.b32.xlu0 %v486, 32
    %v489 = vpop.permute.xlu0 %488
    %v491 = vmul.f32 %v470, %v489
    %v492 = vpack.c.bf16 %v491, %v491
    %494 = vrot.lane.b32.xlu0 %v492, 64
    %v495 = vpop.permute.xlu0 %494
    %vm497 = vcmask 257027
    %498 = vst.msk [vmem:[#allocation2] sm:$0x8] %vm497, %v495
    %v499 = vrot.slane %v492, 3
    %500 = vrot.lane.b32.xlu0 %v499, 64
    %v501 = vpop.permute.xlu0 %500
    %v503 = vsel %vm92, %v501, 0
    %505 = vmatprep.subr.bf16.mxu0 0
    %506 = vmatpush1.bf16.msra.mxu0 %v167
    %507 = vmatprep.subr.bf16.mxu0 0
    %508 = vmatpush1.bf16.msra.mxu0 %v168
    %509 = vmatprep.subr.bf16.mxu0 0
    %510 = vmatpush1.bf16.msra.mxu0 0
    %511 = vmatprep.subr.bf16.mxu0 0
    %512 = vmatpush1.bf16.msra.mxu0 0
    %513 = vmatprep.subr.bf16.mxu0 0
    %514 = vmatpush1.bf16.msra.mxu0 0
    %515 = vmatprep.subr.bf16.mxu0 0
    %516 = vmatpush1.bf16.msra.mxu0 0
    %517 = vmatprep.subr.bf16.mxu0 0
    %518 = vmatpush1.bf16.msra.mxu0 0
    %519 = vmatprep.subr.bf16.mxu0 0
    %520 = vmatpush1.bf16.msra.mxu0 0
    %521 = vmatprep.subr.bf16.mxu0 0
    %522 = vmatpush1.bf16.msra.mxu0 0
    %523 = vmatprep.subr.bf16.mxu0 0
    %524 = vmatpush1.bf16.msra.mxu0 0
    %525 = vmatprep.subr.bf16.mxu0 0
    %526 = vmatpush1.bf16.msra.mxu0 0
    %527 = vmatprep.subr.bf16.mxu0 0
    %528 = vmatpush1.bf16.msra.mxu0 0
    %529 = vmatprep.subr.bf16.mxu0 0
    %530 = vmatpush1.bf16.msra.mxu0 0
    %531 = vmatprep.subr.bf16.mxu0 0
    %532 = vmatpush1.bf16.msra.mxu0 0
    %533 = vmatprep.subr.bf16.mxu0 0
    %534 = vmatpush1.bf16.msra.mxu0 0
    %535 = vmatprep.subr.bf16.mxu0 0
    %536 = vmatpush1.bf16.msra.mxu0 0
    %537 = vmatprep.mubr.bf16.mxu0 0
    %538 = vmatmul.mubr.bf16.gmra.mrb[0].mxu0 %v503
    %v539 = vpop.f32.mrb[0].mxu0
    %v540 = vadd.f32 0.0, %v539
    %v541 = vpop.f32.mrb[0].mxu0
    %v542 = vpop.f32.mrb[0].mxu0
    %v543 = vpop.f32.mrb[0].mxu0
    %544 = vdwg.mxu0
    %v545 = vadd.f32 %v159, %v540
    %v546 = vxor.u32 %v545, 2147483648
    %v547 = vmul.f32 %v546, 1.442695
    %v548 = vpow.pop %v547
    %v549 = vadd.f32 %v548, 1.0
    %v550 = vrcp.pop %v549
    %v551 = vmul.f32 1.0, %v550
    %v552 = vtanh.pop %v545
    %v554 = vrot.slane %v485, 6
    %v556 = vmul.f32 %v551, %v554
    %558 = vrot.lane.b32.xlu0 %v552, 32
    %v559 = vpop.permute.xlu0 %558
    %v561 = vmul.f32 %v551, %v559
    %563 = vrot.lane.b32.xlu0 %v561, 32
    %v564 = vpop.permute.xlu0 %563
    %v566 = vadd.f32 %v556, %v564
    %v567 = vtanh.pop %v566
    %569 = vrot.lane.b32.xlu0 %v567, 32
    %v570 = vpop.permute.xlu0 %569
    %v572 = vmul.f32 %v551, %v570
    %v573 = vpack.c.bf16 %v572, %v572
    %v575 = vrot.slane %v573, 4
    %576 = vrot.lane.b32.xlu0 %v575, 64
    %v577 = vpop.permute.xlu0 %576
    %vm579 = vcmask 258052
    %580 = vst.msk [vmem:[#allocation2] sm:$0x10] %vm579, %v577
    %581 = vrot.lane.b32.xlu0 %v573, 64
    %v582 = vpop.permute.xlu0 %581
    %v584 = vsel %vm92, %v582, 0
    %586 = vmatprep.subr.bf16.mxu0 0
    %587 = vmatpush1.bf16.msra.mxu0 %v167
    %588 = vmatprep.subr.bf16.mxu0 0
    %589 = vmatpush1.bf16.msra.mxu0 %v168
    %590 = vmatprep.subr.bf16.mxu0 0
    %591 = vmatpush1.bf16.msra.mxu0 0
    %592 = vmatprep.subr.bf16.mxu0 0
    %593 = vmatpush1.bf16.msra.mxu0 0
    %594 = vmatprep.subr.bf16.mxu0 0
    %595 = vmatpush1.bf16.msra.mxu0 0
    %596 = vmatprep.subr.bf16.mxu0 0
    %597 = vmatpush1.bf16.msra.mxu0 0
    %598 = vmatprep.subr.bf16.mxu0 0
    %599 = vmatpush1.bf16.msra.mxu0 0
    %600 = vmatprep.subr.bf16.mxu0 0
    %601 = vmatpush1.bf16.msra.mxu0 0
    %602 = vmatprep.subr.bf16.mxu0 0
    %603 = vmatpush1.bf16.msra.mxu0 0
    %604 = vmatprep.subr.bf16.mxu0 0
    %605 = vmatpush1.bf16.msra.mxu0 0
    %606 = vmatprep.subr.bf16.mxu0 0
    %607 = vmatpush1.bf16.msra.mxu0 0
    %608 = vmatprep.subr.bf16.mxu0 0
    %609 = vmatpush1.bf16.msra.mxu0 0
    %610 = vmatprep.subr.bf16.mxu0 0
    %611 = vmatpush1.bf16.msra.mxu0 0
    %612 = vmatprep.subr.bf16.mxu0 0
    %613 = vmatpush1.bf16.msra.mxu0 0
    %614 = vmatprep.subr.bf16.mxu0 0
    %615 = vmatpush1.bf16.msra.mxu0 0
    %616 = vmatprep.subr.bf16.mxu0 0
    %617 = vmatpush1.bf16.msra.mxu0 0
    %618 = vmatprep.mubr.bf16.mxu0 0
    %619 = vmatmul.mubr.bf16.gmra.mrb[0].mxu0 %v584
    %v620 = vpop.f32.mrb[0].mxu0
    %v621 = vadd.f32 0.0, %v620
    %v622 = vpop.f32.mrb[0].mxu0
    %v623 = vpop.f32.mrb[0].mxu0
    %v624 = vpop.f32.mrb[0].mxu0
    %625 = vdwg.mxu0
    %v627 = vrot.slane %v621, 6
    %v629 = vadd.f32 %v159, %v627
    %v630 = vxor.u32 %v629, 2147483648
    %v631 = vmul.f32 %v630, 1.442695
    %v632 = vpow.pop %v631
    %v633 = vadd.f32 %v632, 1.0
    %v634 = vrcp.pop %v633
    %v635 = vmul.f32 1.0, %v634
    %v636 = vtanh.pop %v629
    %v638 = vrot.slane %v566, 6
    %v640 = vmul.f32 %v635, %v638
    %642 = vrot.lane.b32.xlu0 %v636, 32
    %v643 = vpop.permute.xlu0 %642
    %v645 = vmul.f32 %v635, %v643
    %647 = vrot.lane.b32.xlu0 %v645, 32
    %v648 = vpop.permute.xlu0 %647
    %v650 = vadd.f32 %v640, %v648
    %v651 = vtanh.pop %v650
    %653 = vrot.lane.b32.xlu0 %v651, 32
    %v654 = vpop.permute.xlu0 %653
    %v656 = vmul.f32 %v635, %v654
    %v657 = vpack.c.bf16 %v656, %v656
    %v659 = vrot.slane %v657, 4
    %660 = vrot.lane.b32.xlu0 %v659, 64
    %v661 = vpop.permute.xlu0 %660
    %vm663 = vcmask 259077
    %664 = vst.msk [vmem:[#allocation2] sm:$0x20] %vm663, %v661
    %v665 = vrot.slane %v657, 1
    %666 = vrot.lane.b32.xlu0 %v665, 64
    %v667 = vpop.permute.xlu0 %666
    %v669 = vsel %vm92, %v667, 0
    %671 = vmatprep.subr.bf16.mxu0 0
    %672 = vmatpush1.bf16.msra.mxu0 %v167
    %673 = vmatprep.subr.bf16.mxu0 0
    %674 = vmatpush1.bf16.msra.mxu0 %v168
    %675 = vmatprep.subr.bf16.mxu0 0
    %676 = vmatpush1.bf16.msra.mxu0 0
    %677 = vmatprep.subr.bf16.mxu0 0
    %678 = vmatpush1.bf16.msra.mxu0 0
    %679 = vmatprep.subr.bf16.mxu0 0
    %680 = vmatpush1.bf16.msra.mxu0 0
    %681 = vmatprep.subr.bf16.mxu0 0
    %682 = vmatpush1.bf16.msra.mxu0 0
    %683 = vmatprep.subr.bf16.mxu0 0
    %684 = vmatpush1.bf16.msra.mxu0 0
    %685 = vmatprep.subr.bf16.mxu0 0
    %686 = vmatpush1.bf16.msra.mxu0 0
    %687 = vmatprep.subr.bf16.mxu0 0
    %688 = vmatpush1.bf16.msra.mxu0 0
    %689 = vmatprep.subr.bf16.mxu0 0
    %690 = vmatpush1.bf16.msra.mxu0 0
    %691 = vmatprep.subr.bf16.mxu0 0
    %692 = vmatpush1.bf16.msra.mxu0 0
    %693 = vmatprep.subr.bf16.mxu0 0
    %694 = vmatpush1.bf16.msra.mxu0 0
    %695 = vmatprep.subr.bf16.mxu0 0
    %696 = vmatpush1.bf16.msra.mxu0 0
    %697 = vmatprep.subr.bf16.mxu0 0
    %698 = vmatpush1.bf16.msra.mxu0 0
    %699 = vmatprep.subr.bf16.mxu0 0
    %700 = vmatpush1.bf16.msra.mxu0 0
    %701 = vmatprep.subr.bf16.mxu0 0
    %702 = vmatpush1.bf16.msra.mxu0 0
    %703 = vmatprep.mubr.bf16.mxu0 0
    %704 = vmatmul.mubr.bf16.gmra.mrb[0].mxu0 %v669
    %v705 = vpop.f32.mrb[0].mxu0
    %v706 = vadd.f32 0.0, %v705
    %v707 = vpop.f32.mrb[0].mxu0
    %v708 = vpop.f32.mrb[0].mxu0
    %v709 = vpop.f32.mrb[0].mxu0
    %710 = vdwg.mxu0
    %v712 = vrot.slane %v706, 4
    %v714 = vadd.f32 %v159, %v712
    %v715 = vxor.u32 %v714, 2147483648
    %v716 = vmul.f32 %v715, 1.442695
    %v717 = vpow.pop %v716
    %v718 = vadd.f32 %v717, 1.0
    %v719 = vrcp.pop %v718
    %v720 = vmul.f32 1.0, %v719
    %v721 = vtanh.pop %v714
    %v723 = vrot.slane %v650, 6
    %v725 = vmul.f32 %v720, %v723
    %727 = vrot.lane.b32.xlu0 %v721, 32
    %v728 = vpop.permute.xlu0 %727
    %v730 = vmul.f32 %v720, %v728
    %732 = vrot.lane.b32.xlu0 %v730, 32
    %v733 = vpop.permute.xlu0 %732
    %v735 = vadd.f32 %v725, %v733
    %v736 = vtanh.pop %v735
    %738 = vrot.lane.b32.xlu0 %v736, 32
    %v739 = vpop.permute.xlu0 %738
    %v741 = vmul.f32 %v720, %v739
    %v742 = vpack.c.bf16 %v741, %v741
    %v744 = vrot.slane %v742, 4
    %745 = vrot.lane.b32.xlu0 %v744, 64
    %v746 = vpop.permute.xlu0 %745
    %vm748 = vcmask 260102
    %749 = vst.msk [vmem:[#allocation2] sm:$0x40] %vm748, %v746
    %v750 = vrot.slane %v742, 2
    %751 = vrot.lane.b32.xlu0 %v750, 64
    %v752 = vpop.permute.xlu0 %751
    %v754 = vsel %vm92, %v752, 0
    %756 = vmatprep.subr.bf16.mxu0 0
    %757 = vmatpush1.bf16.msra.mxu0 %v167
    %758 = vmatprep.subr.bf16.mxu0 0
    %759 = vmatpush1.bf16.msra.mxu0 %v168
    %760 = vmatprep.subr.bf16.mxu0 0
    %761 = vmatpush1.bf16.msra.mxu0 0
    %762 = vmatprep.subr.bf16.mxu0 0
    %763 = vmatpush1.bf16.msra.mxu0 0
    %764 = vmatprep.subr.bf16.mxu0 0
    %765 = vmatpush1.bf16.msra.mxu0 0
    %766 = vmatprep.subr.bf16.mxu0 0
    %767 = vmatpush1.bf16.msra.mxu0 0
    %768 = vmatprep.subr.bf16.mxu0 0
    %769 = vmatpush1.bf16.msra.mxu0 0
    %770 = vmatprep.subr.bf16.mxu0 0
    %771 = vmatpush1.bf16.msra.mxu0 0
    %772 = vmatprep.subr.bf16.mxu0 0
    %773 = vmatpush1.bf16.msra.mxu0 0
    %774 = vmatprep.subr.bf16.mxu0 0
    %775 = vmatpush1.bf16.msra.mxu0 0
    %776 = vmatprep.subr.bf16.mxu0 0
    %777 = vmatpush1.bf16.msra.mxu0 0
    %778 = vmatprep.subr.bf16.mxu0 0
    %779 = vmatpush1.bf16.msra.mxu0 0
    %780 = vmatprep.subr.bf16.mxu0 0
    %781 = vmatpush1.bf16.msra.mxu0 0
    %782 = vmatprep.subr.bf16.mxu0 0
    %783 = vmatpush1.bf16.msra.mxu0 0
    %784 = vmatprep.subr.bf16.mxu0 0
    %785 = vmatpush1.bf16.msra.mxu0 0
    %786 = vmatprep.subr.bf16.mxu0 0
    %787 = vmatpush1.bf16.msra.mxu0 0
    %788 = vmatprep.mubr.bf16.mxu0 0
    %789 = vmatmul.mubr.bf16.gmra.mrb[0].mxu0 %v754
    %v790 = vpop.f32.mrb[0].mxu0
    %v791 = vadd.f32 0.0, %v790
    %v792 = vpop.f32.mrb[0].mxu0
    %v793 = vpop.f32.mrb[0].mxu0
    %v794 = vpop.f32.mrb[0].mxu0
    %795 = vdwg.mxu0
    %v797 = vrot.slane %v791, 2
    %v799 = vadd.f32 %v159, %v797
    %v800 = vxor.u32 %v799, 2147483648
    %v801 = vmul.f32 %v800, 1.442695
    %v802 = vpow.pop %v801
    %v803 = vadd.f32 %v802, 1.0
    %v804 = vrcp.pop %v803
    %v805 = vmul.f32 1.0, %v804
    %v806 = vtanh.pop %v799
    %v808 = vrot.slane %v735, 6
    %v810 = vmul.f32 %v805, %v808
    %812 = vrot.lane.b32.xlu0 %v806, 32
    %v813 = vpop.permute.xlu0 %812
    %v815 = vmul.f32 %v805, %v813
    %817 = vrot.lane.b32.xlu0 %v815, 32
    %v818 = vpop.permute.xlu0 %817
    %v820 = vadd.f32 %v810, %v818
    %v821 = vtanh.pop %v820
    %823 = vrot.lane.b32.xlu0 %v821, 32
    %v824 = vpop.permute.xlu0 %823
    %v826 = vmul.f32 %v805, %v824
    %v827 = vpack.c.bf16 %v826, %v826
    %v829 = vrot.slane %v827, 4
    %830 = vrot.lane.b32.xlu0 %v829, 64
    %v831 = vpop.permute.xlu0 %830
    %vm833 = vcmask 261127
    %834 = vst.msk [vmem:[#allocation2] sm:$0x80] %vm833, %v831
    %836 = vrot.lane.b32.xlu0 %v826, 64
    %v837 = vpop.permute.xlu0 %836
    %vm839 = vcmask 261126
    %840 = vst.msk [vmem:[%s7 - $0x6] sm:$0xc0] %vm839, %v837
    %842 = vrot.lane.b32.xlu0 %v820, 96
    %v843 = vpop.permute.xlu0 %842
    %s845 = scalar_lea.vmem %s7, 4
    %846 = vst.msk [vmem:[%s845 - $0x6] sm:$0xc0] %vm839, %v843
    %s847 = scalar_lea.vmem %s2, 32
    %v848 = vld [vmem:[%s847] sm:$0xff]
    %v849 = vld [vmem:[%s847 + $0x8] sm:$0xff]
    %v850 = vld [vmem:[%s847 + $0x10] sm:$0xff]
    %v851 = vld [vmem:[%s847 + $0x18] sm:$0xff]
    %s852 = scalar_lea.vmem %s4, 2
    %v853 = vld [vmem:[%s852] sm:$0x3]
    %s854 = scalar_lea.vmem %s4, 6
    %v855 = vld [vmem:[%s854] sm:$0x3]
    %v856 = vld [vmem:[#allocation2] sm:$0xff]
    %v857 = vlaneseq
    %v858 = vshrl.u32 %v857, 7
    %v859 = vsub.s32 1, %v858
    %v860 = vrot.slane %v27, %v859
    %v865 = vunpack.c.l.b16 %v848
    %v866 = vunpack.c.l.b16 %v849
    %v867 = vunpack.c.l.b16 %v850
    %v868 = vunpack.c.l.b16 %v851
    %v869 = vpack.c.b16 %v866, %v865
    %v870 = vpack.c.b16 %v868, %v867
    %v874 = vsel %vm92, %v856, 0
    %876 = vmatprep.subr.bf16.mxu0 0
    %877 = vmatpush1.bf16.msra.mxu0 %v869
    %878 = vmatprep.subr.bf16.mxu0 0
    %879 = vmatpush1.bf16.msra.mxu0 %v870
    %880 = vmatprep.subr.bf16.mxu0 0
    %881 = vmatpush1.bf16.msra.mxu0 0
    %882 = vmatprep.subr.bf16.mxu0 0
    %883 = vmatpush1.bf16.msra.mxu0 0
    %884 = vmatprep.subr.bf16.mxu0 0
    %885 = vmatpush1.bf16.msra.mxu0 0
    %886 = vmatprep.subr.bf16.mxu0 0
    %887 = vmatpush1.bf16.msra.mxu0 0
    %888 = vmatprep.subr.bf16.mxu0 0
    %889 = vmatpush1.bf16.msra.mxu0 0
    %890 = vmatprep.subr.bf16.mxu0 0
    %891 = vmatpush1.bf16.msra.mxu0 0
    %892 = vmatprep.subr.bf16.mxu0 0
    %893 = vmatpush1.bf16.msra.mxu0 0
    %894 = vmatprep.subr.bf16.mxu0 0
    %895 = vmatpush1.bf16.msra.mxu0 0
    %896 = vmatprep.subr.bf16.mxu0 0
    %897 = vmatpush1.bf16.msra.mxu0 0
    %898 = vmatprep.subr.bf16.mxu0 0
    %899 = vmatpush1.bf16.msra.mxu0 0
    %900 = vmatprep.subr.bf16.mxu0 0
    %901 = vmatpush1.bf16.msra.mxu0 0
    %902 = vmatprep.subr.bf16.mxu0 0
    %903 = vmatpush1.bf16.msra.mxu0 0
    %904 = vmatprep.subr.bf16.mxu0 0
    %905 = vmatpush1.bf16.msra.mxu0 0
    %906 = vmatprep.subr.bf16.mxu0 0
    %907 = vmatpush1.bf16.msra.mxu0 0
    %908 = vmatprep.mubr.bf16.mxu0 0
    %909 = vmatmul.mubr.bf16.gmra.mrb[0].mxu0 %v874
    %v910 = vpop.f32.mrb[0].mxu0
    %v911 = vadd.f32 %v860, %v910
    %v912 = vpop.f32.mrb[0].mxu0
    %v913 = vpop.f32.mrb[0].mxu0
    %v914 = vadd.f32 %v860, %v913
    %v915 = vpop.f32.mrb[0].mxu0
    %916 = vdwg.mxu0
    %v917 = vpack.c.bf16 %v853, %v853
    %v918 = vunpack.c.h.b16 %v848
    %v919 = vunpack.c.h.b16 %v849
    %v920 = vunpack.c.h.b16 %v850
    %v921 = vunpack.c.h.b16 %v851
    %v922 = vpack.c.b16 %v919, %v918
    %v923 = vpack.c.b16 %v921, %v920
    %v927 = vsel %vm92, %v917, 0
    %929 = vmatprep.subr.bf16.mxu0 0
    %930 = vmatpush1.bf16.msra.mxu0 %v922
    %931 = vmatprep.subr.bf16.mxu0 0
    %932 = vmatpush1.bf16.msra.mxu0 %v923
    %933 = vmatprep.subr.bf16.mxu0 0
    %934 = vmatpush1.bf16.msra.mxu0 0
    %935 = vmatprep.subr.bf16.mxu0 0
    %936 = vmatpush1.bf16.msra.mxu0 0
    %937 = vmatprep.subr.bf16.mxu0 0
    %938 = vmatpush1.bf16.msra.mxu0 0
    %939 = vmatprep.subr.bf16.mxu0 0
    %940 = vmatpush1.bf16.msra.mxu0 0
    %941 = vmatprep.subr.bf16.mxu0 0
    %942 = vmatpush1.bf16.msra.mxu0 0
    %943 = vmatprep.subr.bf16.mxu0 0
    %944 = vmatpush1.bf16.msra.mxu0 0
    %945 = vmatprep.subr.bf16.mxu0 0
    %946 = vmatpush1.bf16.msra.mxu0 0
    %947 = vmatprep.subr.bf16.mxu0 0
    %948 = vmatpush1.bf16.msra.mxu0 0
    %949 = vmatprep.subr.bf16.mxu0 0
    %950 = vmatpush1.bf16.msra.mxu0 0
    %951 = vmatprep.subr.bf16.mxu0 0
    %952 = vmatpush1.bf16.msra.mxu0 0
    %953 = vmatprep.subr.bf16.mxu0 0
    %954 = vmatpush1.bf16.msra.mxu0 0
    %955 = vmatprep.subr.bf16.mxu0 0
    %956 = vmatpush1.bf16.msra.mxu0 0
    %957 = vmatprep.subr.bf16.mxu0 0
    %958 = vmatpush1.bf16.msra.mxu0 0
    %959 = vmatprep.subr.bf16.mxu0 0
    %960 = vmatpush1.bf16.msra.mxu0 0
    %961 = vmatprep.mubr.bf16.mxu0 0
    %962 = vmatmul.mubr.bf16.gmra.mrb[0].mxu0 %v927
    %v963 = vpop.f32.mrb[0].mxu0
    %v964 = vadd.f32 0.0, %v963
    %v965 = vpop.f32.mrb[0].mxu0
    %v966 = vpop.f32.mrb[0].mxu0
    %v967 = vpop.f32.mrb[0].mxu0
    %968 = vdwg.mxu0
    %v969 = vadd.f32 %v911, %v964
    %v970 = vxor.u32 %v969, 2147483648
    %v971 = vmul.f32 %v970, 1.442695
    %v972 = vpow.pop %v971
    %v973 = vadd.f32 %v972, 1.0
    %v974 = vrcp.pop %v973
    %v975 = vmul.f32 1.0, %v974
    %v976 = vtanh.pop %v969
    %978 = vrot.lane.b32.xlu0 %v855, 32
    %v979 = vpop.permute.xlu0 %978
    %v981 = vmul.f32 %v975, %v979
    %983 = vrot.lane.b32.xlu0 %v976, 32
    %v984 = vpop.permute.xlu0 %983
    %v986 = vmul.f32 %v975, %v984
    %988 = vrot.lane.b32.xlu0 %v986, 32
    %v989 = vpop.permute.xlu0 %988
    %v991 = vadd.f32 %v981, %v989
    %v992 = vtanh.pop %v991
    %994 = vrot.lane.b32.xlu0 %v992, 32
    %v995 = vpop.permute.xlu0 %994
    %v997 = vmul.f32 %v975, %v995
    %v998 = vpack.c.bf16 %v997, %v997
    %1000 = vrot.lane.b32.xlu0 %v998, 64
    %v1001 = vpop.permute.xlu0 %1000
    %v1003 = vsel %vm92, %v1001, 0
    %1005 = vmatprep.subr.bf16.mxu0 0
    %1006 = vmatpush1.bf16.msra.mxu0 %v922
    %1007 = vmatprep.subr.bf16.mxu0 0
    %1008 = vmatpush1.bf16.msra.mxu0 %v923
    %1009 = vmatprep.subr.bf16.mxu0 0
    %1010 = vmatpush1.bf16.msra.mxu0 0
    %1011 = vmatprep.subr.bf16.mxu0 0
    %1012 = vmatpush1.bf16.msra.mxu0 0
    %1013 = vmatprep.subr.bf16.mxu0 0
    %1014 = vmatpush1.bf16.msra.mxu0 0
    %1015 = vmatprep.subr.bf16.mxu0 0
    %1016 = vmatpush1.bf16.msra.mxu0 0
    %1017 = vmatprep.subr.bf16.mxu0 0
    %1018 = vmatpush1.bf16.msra.mxu0 0
    %1019 = vmatprep.subr.bf16.mxu0 0
    %1020 = vmatpush1.bf16.msra.mxu0 0
    %1021 = vmatprep.subr.bf16.mxu0 0
    %1022 = vmatpush1.bf16.msra.mxu0 0
    %1023 = vmatprep.subr.bf16.mxu0 0
    %1024 = vmatpush1.bf16.msra.mxu0 0
    %1025 = vmatprep.subr.bf16.mxu0 0
    %1026 = vmatpush1.bf16.msra.mxu0 0
    %1027 = vmatprep.subr.bf16.mxu0 0
    %1028 = vmatpush1.bf16.msra.mxu0 0
    %1029 = vmatprep.subr.bf16.mxu0 0
    %1030 = vmatpush1.bf16.msra.mxu0 0
    %1031 = vmatprep.subr.bf16.mxu0 0
    %1032 = vmatpush1.bf16.msra.mxu0 0
    %1033 = vmatprep.subr.bf16.mxu0 0
    %1034 = vmatpush1.bf16.msra.mxu0 0
    %1035 = vmatprep.subr.bf16.mxu0 0
    %1036 = vmatpush1.bf16.msra.mxu0 0
    %1037 = vmatprep.mubr.bf16.mxu0 0
    %1038 = vmatmul.mubr.bf16.gmra.mrb[0].mxu0 %v1003
    %v1039 = vpop.f32.mrb[0].mxu0
    %v1040 = vadd.f32 0.0, %v1039
    %v1041 = vpop.f32.mrb[0].mxu0
    %v1042 = vpop.f32.mrb[0].mxu0
    %v1043 = vpop.f32.mrb[0].mxu0
    %1044 = vdwg.mxu0
    %v1046 = vrot.slane %v1040, 6
    %v1048 = vadd.f32 %v911, %v1046
    %v1049 = vxor.u32 %v1048, 2147483648
    %v1050 = vmul.f32 %v1049, 1.442695
    %v1051 = vpow.pop %v1050
    %v1052 = vadd.f32 %v1051, 1.0
    %v1053 = vrcp.pop %v1052
    %v1054 = vmul.f32 1.0, %v1053
    %v1055 = vtanh.pop %v1048
    %v1057 = vrot.slane %v991, 6
    %v1059 = vmul.f32 %v1054, %v1057
    %1061 = vrot.lane.b32.xlu0 %v1055, 32
    %v1062 = vpop.permute.xlu0 %1061
    %v1064 = vmul.f32 %v1054, %v1062
    %1066 = vrot.lane.b32.xlu0 %v1064, 32
    %v1067 = vpop.permute.xlu0 %1066
    %v1069 = vadd.f32 %v1059, %v1067
    %v1070 = vtanh.pop %v1069
    %1072 = vrot.lane.b32.xlu0 %v1070, 32
    %v1073 = vpop.permute.xlu0 %1072
    %v1075 = vmul.f32 %v1054, %v1073
    %v1076 = vpack.c.bf16 %v1075, %v1075
    %v1078 = vrot.slane %v1076, 1
    %1079 = vrot.lane.b32.xlu0 %v1078, 64
    %v1080 = vpop.permute.xlu0 %1079
    %v1082 = vsel %vm92, %v1080, 0
    %1084 = vmatprep.subr.bf16.mxu0 0
    %1085 = vmatpush1.bf16.msra.mxu0 %v922
    %1086 = vmatprep.subr.bf16.mxu0 0
    %1087 = vmatpush1.bf16.msra.mxu0 %v923
    %1088 = vmatprep.subr.bf16.mxu0 0
    %1089 = vmatpush1.bf16.msra.mxu0 0
    %1090 = vmatprep.subr.bf16.mxu0 0
    %1091 = vmatpush1.bf16.msra.mxu0 0
    %1092 = vmatprep.subr.bf16.mxu0 0
    %1093 = vmatpush1.bf16.msra.mxu0 0
    %1094 = vmatprep.subr.bf16.mxu0 0
    %1095 = vmatpush1.bf16.msra.mxu0 0
    %1096 = vmatprep.subr.bf16.mxu0 0
    %1097 = vmatpush1.bf16.msra.mxu0 0
    %1098 = vmatprep.subr.bf16.mxu0 0
    %1099 = vmatpush1.bf16.msra.mxu0 0
    %1100 = vmatprep.subr.bf16.mxu0 0
    %1101 = vmatpush1.bf16.msra.mxu0 0
    %1102 = vmatprep.subr.bf16.mxu0 0
    %1103 = vmatpush1.bf16.msra.mxu0 0
    %1104 = vmatprep.subr.bf16.mxu0 0
    %1105 = vmatpush1.bf16.msra.mxu0 0
    %1106 = vmatprep.subr.bf16.mxu0 0
    %1107 = vmatpush1.bf16.msra.mxu0 0
    %1108 = vmatprep.subr.bf16.mxu0 0
    %1109 = vmatpush1.bf16.msra.mxu0 0
    %1110 = vmatprep.subr.bf16.mxu0 0
    %1111 = vmatpush1.bf16.msra.mxu0 0
    %1112 = vmatprep.subr.bf16.mxu0 0
    %1113 = vmatpush1.bf16.msra.mxu0 0
    %1114 = vmatprep.subr.bf16.mxu0 0
    %1115 = vmatpush1.bf16.msra.mxu0 0
    %1116 = vmatprep.mubr.bf16.mxu0 0
    %1117 = vmatmul.mubr.bf16.gmra.mrb[0].mxu0 %v1082
    %v1118 = vpop.f32.mrb[0].mxu0
    %v1119 = vadd.f32 0.0, %v1118
    %v1120 = vpop.f32.mrb[0].mxu0
    %v1121 = vpop.f32.mrb[0].mxu0
    %v1122 = vpop.f32.mrb[0].mxu0
    %1123 = vdwg.mxu0
    %v1125 = vrot.slane %v1119, 4
    %v1127 = vadd.f32 %v911, %v1125
    %v1128 = vxor.u32 %v1127, 2147483648
    %v1129 = vmul.f32 %v1128, 1.442695
    %v1130 = vpow.pop %v1129
    %v1131 = vadd.f32 %v1130, 1.0
    %v1132 = vrcp.pop %v1131
    %v1133 = vmul.f32 1.0, %v1132
    %v1134 = vtanh.pop %v1127
    %v1136 = vrot.slane %v1069, 6
    %v1138 = vmul.f32 %v1133, %v1136
    %1140 = vrot.lane.b32.xlu0 %v1134, 32
    %v1141 = vpop.permute.xlu0 %1140
    %v1143 = vmul.f32 %v1133, %v1141
    %1145 = vrot.lane.b32.xlu0 %v1143, 32
    %v1146 = vpop.permute.xlu0 %1145
    %v1148 = vadd.f32 %v1138, %v1146
    %v1149 = vtanh.pop %v1148
    %1151 = vrot.lane.b32.xlu0 %v1149, 32
    %v1152 = vpop.permute.xlu0 %1151
    %v1154 = vmul.f32 %v1133, %v1152
    %v1155 = vpack.c.bf16 %v1154, %v1154
    %v1157 = vrot.slane %v1155, 2
    %1158 = vrot.lane.b32.xlu0 %v1157, 64
    %v1159 = vpop.permute.xlu0 %1158
    %v1161 = vsel %vm92, %v1159, 0
    %1163 = vmatprep.subr.bf16.mxu0 0
    %1164 = vmatpush1.bf16.msra.mxu0 %v922
    %1165 = vmatprep.subr.bf16.mxu0 0
    %1166 = vmatpush1.bf16.msra.mxu0 %v923
    %1167 = vmatprep.subr.bf16.mxu0 0
    %1168 = vmatpush1.bf16.msra.mxu0 0
    %1169 = vmatprep.subr.bf16.mxu0 0
    %1170 = vmatpush1.bf16.msra.mxu0 0
    %1171 = vmatprep.subr.bf16.mxu0 0
    %1172 = vmatpush1.bf16.msra.mxu0 0
    %1173 = vmatprep.subr.bf16.mxu0 0
    %1174 = vmatpush1.bf16.msra.mxu0 0
    %1175 = vmatprep.subr.bf16.mxu0 0
    %1176 = vmatpush1.bf16.msra.mxu0 0
    %1177 = vmatprep.subr.bf16.mxu0 0
    %1178 = vmatpush1.bf16.msra.mxu0 0
    %1179 = vmatprep.subr.bf16.mxu0 0
    %1180 = vmatpush1.bf16.msra.mxu0 0
    %1181 = vmatprep.subr.bf16.mxu0 0
    %1182 = vmatpush1.bf16.msra.mxu0 0
    %1183 = vmatprep.subr.bf16.mxu0 0
    %1184 = vmatpush1.bf16.msra.mxu0 0
    %1185 = vmatprep.subr.bf16.mxu0 0
    %1186 = vmatpush1.bf16.msra.mxu0 0
    %1187 = vmatprep.subr.bf16.mxu0 0
    %1188 = vmatpush1.bf16.msra.mxu0 0
    %1189 = vmatprep.subr.bf16.mxu0 0
    %1190 = vmatpush1.bf16.msra.mxu0 0
    %1191 = vmatprep.subr.bf16.mxu0 0
    %1192 = vmatpush1.bf16.msra.mxu0 0
    %1193 = vmatprep.subr.bf16.mxu0 0
    %1194 = vmatpush1.bf16.msra.mxu0 0
    %1195 = vmatprep.mubr.bf16.mxu0 0
    %1196 = vmatmul.mubr.bf16.gmra.mrb[0].mxu0 %v1161
    %v1197 = vpop.f32.mrb[0].mxu0
    %v1198 = vadd.f32 0.0, %v1197
    %v1199 = vpop.f32.mrb[0].mxu0
    %v1200 = vpop.f32.mrb[0].mxu0
    %v1201 = vpop.f32.mrb[0].mxu0
    %1202 = vdwg.mxu0
    %v1204 = vrot.slane %v1198, 2
    %v1206 = vadd.f32 %v911, %v1204
    %v1207 = vxor.u32 %v1206, 2147483648
    %v1208 = vmul.f32 %v1207, 1.442695
    %v1209 = vpow.pop %v1208
    %v1210 = vadd.f32 %v1209, 1.0
    %v1211 = vrcp.pop %v1210
    %v1212 = vmul.f32 1.0, %v1211
    %v1213 = vtanh.pop %v1206
    %v1215 = vrot.slane %v1148, 6
    %v1217 = vmul.f32 %v1212, %v1215
    %1219 = vrot.lane.b32.xlu0 %v1213, 32
    %v1220 = vpop.permute.xlu0 %1219
    %v1222 = vmul.f32 %v1212, %v1220
    %1224 = vrot.lane.b32.xlu0 %v1222, 32
    %v1225 = vpop.permute.xlu0 %1224
    %v1227 = vadd.f32 %v1217, %v1225
    %v1228 = vtanh.pop %v1227
    %1230 = vrot.lane.b32.xlu0 %v1228, 32
    %v1231 = vpop.permute.xlu0 %1230
    %v1233 = vmul.f32 %v1212, %v1231
    %v1234 = vpack.c.bf16 %v1233, %v1233
    %v1236 = vrot.slane %v1234, 3
    %1237 = vrot.lane.b32.xlu0 %v1236, 64
    %v1238 = vpop.permute.xlu0 %1237
    %v1240 = vsel %vm92, %v1238, 0
    %1242 = vmatprep.subr.bf16.mxu0 0
    %1243 = vmatpush1.bf16.msra.mxu0 %v922
    %1244 = vmatprep.subr.bf16.mxu0 0
    %1245 = vmatpush1.bf16.msra.mxu0 %v923
    %1246 = vmatprep.subr.bf16.mxu0 0
    %1247 = vmatpush1.bf16.msra.mxu0 0
    %1248 = vmatprep.subr.bf16.mxu0 0
    %1249 = vmatpush1.bf16.msra.mxu0 0
    %1250 = vmatprep.subr.bf16.mxu0 0
    %1251 = vmatpush1.bf16.msra.mxu0 0
    %1252 = vmatprep.subr.bf16.mxu0 0
    %1253 = vmatpush1.bf16.msra.mxu0 0
    %1254 = vmatprep.subr.bf16.mxu0 0
    %1255 = vmatpush1.bf16.msra.mxu0 0
    %1256 = vmatprep.subr.bf16.mxu0 0
    %1257 = vmatpush1.bf16.msra.mxu0 0
    %1258 = vmatprep.subr.bf16.mxu0 0
    %1259 = vmatpush1.bf16.msra.mxu0 0
    %1260 = vmatprep.subr.bf16.mxu0 0
    %1261 = vmatpush1.bf16.msra.mxu0 0
    %1262 = vmatprep.subr.bf16.mxu0 0
    %1263 = vmatpush1.bf16.msra.mxu0 0
    %1264 = vmatprep.subr.bf16.mxu0 0
    %1265 = vmatpush1.bf16.msra.mxu0 0
    %1266 = vmatprep.subr.bf16.mxu0 0
    %1267 = vmatpush1.bf16.msra.mxu0 0
    %1268 = vmatprep.subr.bf16.mxu0 0
    %1269 = vmatpush1.bf16.msra.mxu0 0
    %1270 = vmatprep.subr.bf16.mxu0 0
    %1271 = vmatpush1.bf16.msra.mxu0 0
    %1272 = vmatprep.subr.bf16.mxu0 0
    %1273 = vmatpush1.bf16.msra.mxu0 0
    %1274 = vmatprep.mubr.bf16.mxu0 0
    %1275 = vmatmul.mubr.bf16.gmra.mrb[0].mxu0 %v1240
    %v1276 = vpop.f32.mrb[0].mxu0
    %v1277 = vadd.f32 0.0, %v1276
    %v1278 = vpop.f32.mrb[0].mxu0
    %v1279 = vpop.f32.mrb[0].mxu0
    %v1280 = vpop.f32.mrb[0].mxu0
    %1281 = vdwg.mxu0
    %v1282 = vadd.f32 %v914, %v1277
    %v1283 = vxor.u32 %v1282, 2147483648
    %v1284 = vmul.f32 %v1283, 1.442695
    %v1285 = vpow.pop %v1284
    %v1286 = vadd.f32 %v1285, 1.0
    %v1287 = vrcp.pop %v1286
    %v1288 = vmul.f32 1.0, %v1287
    %v1289 = vtanh.pop %v1282
    %v1291 = vrot.slane %v1227, 6
    %v1293 = vmul.f32 %v1288, %v1291
    %1295 = vrot.lane.b32.xlu0 %v1289, 32
    %v1296 = vpop.permute.xlu0 %1295
    %v1298 = vmul.f32 %v1288, %v1296
    %1300 = vrot.lane.b32.xlu0 %v1298, 32
    %v1301 = vpop.permute.xlu0 %1300
    %v1303 = vadd.f32 %v1293, %v1301
    %v1304 = vtanh.pop %v1303
    %1306 = vrot.lane.b32.xlu0 %v1304, 32
    %v1307 = vpop.permute.xlu0 %1306
    %v1309 = vmul.f32 %v1288, %v1307
    %v1310 = vpack.c.bf16 %v1309, %v1309
    %1312 = vrot.lane.b32.xlu0 %v1310, 64
    %v1313 = vpop.permute.xlu0 %1312
    %v1315 = vsel %vm92, %v1313, 0
    %1317 = vmatprep.subr.bf16.mxu0 0
    %1318 = vmatpush1.bf16.msra.mxu0 %v922
    %1319 = vmatprep.subr.bf16.mxu0 0
    %1320 = vmatpush1.bf16.msra.mxu0 %v923
    %1321 = vmatprep.subr.bf16.mxu0 0
    %1322 = vmatpush1.bf16.msra.mxu0 0
    %1323 = vmatprep.subr.bf16.mxu0 0
    %1324 = vmatpush1.bf16.msra.mxu0 0
    %1325 = vmatprep.subr.bf16.mxu0 0
    %1326 = vmatpush1.bf16.msra.mxu0 0
    %1327 = vmatprep.subr.bf16.mxu0 0
    %1328 = vmatpush1.bf16.msra.mxu0 0
    %1329 = vmatprep.subr.bf16.mxu0 0
    %1330 = vmatpush1.bf16.msra.mxu0 0
    %1331 = vmatprep.subr.bf16.mxu0 0
    %1332 = vmatpush1.bf16.msra.mxu0 0
    %1333 = vmatprep.subr.bf16.mxu0 0
    %1334 = vmatpush1.bf16.msra.mxu0 0
    %1335 = vmatprep.subr.bf16.mxu0 0
    %1336 = vmatpush1.bf16.msra.mxu0 0
    %1337 = vmatprep.subr.bf16.mxu0 0
    %1338 = vmatpush1.bf16.msra.mxu0 0
    %1339 = vmatprep.subr.bf16.mxu0 0
    %1340 = vmatpush1.bf16.msra.mxu0 0
    %1341 = vmatprep.subr.bf16.mxu0 0
    %1342 = vmatpush1.bf16.msra.mxu0 0
    %1343 = vmatprep.subr.bf16.mxu0 0
    %1344 = vmatpush1.bf16.msra.mxu0 0
    %1345 = vmatprep.subr.bf16.mxu0 0
    %1346 = vmatpush1.bf16.msra.mxu0 0
    %1347 = vmatprep.subr.bf16.mxu0 0
    %1348 = vmatpush1.bf16.msra.mxu0 0
    %1349 = vmatprep.mubr.bf16.mxu0 0
    %1350 = vmatmul.mubr.bf16.gmra.mrb[0].mxu0 %v1315
    %v1351 = vpop.f32.mrb[0].mxu0
    %v1352 = vadd.f32 0.0, %v1351
    %v1353 = vpop.f32.mrb[0].mxu0
    %v1354 = vpop.f32.mrb[0].mxu0
    %v1355 = vpop.f32.mrb[0].mxu0
    %1356 = vdwg.mxu0
    %v1358 = vrot.slane %v1352, 6
    %v1360 = vadd.f32 %v914, %v1358
    %v1361 = vxor.u32 %v1360, 2147483648
    %v1362 = vmul.f32 %v1361, 1.442695
    %v1363 = vpow.pop %v1362
    %v1364 = vadd.f32 %v1363, 1.0
    %v1365 = vrcp.pop %v1364
    %v1366 = vmul.f32 1.0, %v1365
    %v1367 = vtanh.pop %v1360
    %v1369 = vrot.slane %v1303, 6
    %v1371 = vmul.f32 %v1366, %v1369
    %1373 = vrot.lane.b32.xlu0 %v1367, 32
    %v1374 = vpop.permute.xlu0 %1373
    %v1376 = vmul.f32 %v1366, %v1374
    %1378 = vrot.lane.b32.xlu0 %v1376, 32
    %v1379 = vpop.permute.xlu0 %1378
    %v1381 = vadd.f32 %v1371, %v1379
    %v1382 = vtanh.pop %v1381
    %1384 = vrot.lane.b32.xlu0 %v1382, 32
    %v1385 = vpop.permute.xlu0 %1384
    %v1387 = vmul.f32 %v1366, %v1385
    %v1388 = vpack.c.bf16 %v1387, %v1387
    %v1390 = vrot.slane %v1388, 1
    %1391 = vrot.lane.b32.xlu0 %v1390, 64
    %v1392 = vpop.permute.xlu0 %1391
    %v1394 = vsel %vm92, %v1392, 0
    %1396 = vmatprep.subr.bf16.mxu0 0
    %1397 = vmatpush1.bf16.msra.mxu0 %v922
    %1398 = vmatprep.subr.bf16.mxu0 0
    %1399 = vmatpush1.bf16.msra.mxu0 %v923
    %1400 = vmatprep.subr.bf16.mxu0 0
    %1401 = vmatpush1.bf16.msra.mxu0 0
    %1402 = vmatprep.subr.bf16.mxu0 0
    %1403 = vmatpush1.bf16.msra.mxu0 0
    %1404 = vmatprep.subr.bf16.mxu0 0
    %1405 = vmatpush1.bf16.msra.mxu0 0
    %1406 = vmatprep.subr.bf16.mxu0 0
    %1407 = vmatpush1.bf16.msra.mxu0 0
    %1408 = vmatprep.subr.bf16.mxu0 0
    %1409 = vmatpush1.bf16.msra.mxu0 0
    %1410 = vmatprep.subr.bf16.mxu0 0
    %1411 = vmatpush1.bf16.msra.mxu0 0
    %1412 = vmatprep.subr.bf16.mxu0 0
    %1413 = vmatpush1.bf16.msra.mxu0 0
    %1414 = vmatprep.subr.bf16.mxu0 0
    %1415 = vmatpush1.bf16.msra.mxu0 0
    %1416 = vmatprep.subr.bf16.mxu0 0
    %1417 = vmatpush1.bf16.msra.mxu0 0
    %1418 = vmatprep.subr.bf16.mxu0 0
    %1419 = vmatpush1.bf16.msra.mxu0 0
    %1420 = vmatprep.subr.bf16.mxu0 0
    %1421 = vmatpush1.bf16.msra.mxu0 0
    %1422 = vmatprep.subr.bf16.mxu0 0
    %1423 = vmatpush1.bf16.msra.mxu0 0
    %1424 = vmatprep.subr.bf16.mxu0 0
    %1425 = vmatpush1.bf16.msra.mxu0 0
    %1426 = vmatprep.subr.bf16.mxu0 0
    %1427 = vmatpush1.bf16.msra.mxu0 0
    %1428 = vmatprep.mubr.bf16.mxu0 0
    %1429 = vmatmul.mubr.bf16.gmra.mrb[0].mxu0 %v1394
    %v1430 = vpop.f32.mrb[0].mxu0
    %v1431 = vadd.f32 0.0, %v1430
    %v1432 = vpop.f32.mrb[0].mxu0
    %v1433 = vpop.f32.mrb[0].mxu0
    %v1434 = vpop.f32.mrb[0].mxu0
    %1435 = vdwg.mxu0
    %v1437 = vrot.slane %v1431, 4
    %v1439 = vadd.f32 %v914, %v1437
    %v1440 = vxor.u32 %v1439, 2147483648
    %v1441 = vmul.f32 %v1440, 1.442695
    %v1442 = vpow.pop %v1441
    %v1443 = vadd.f32 %v1442, 1.0
    %v1444 = vrcp.pop %v1443
    %v1445 = vmul.f32 1.0, %v1444
    %v1446 = vtanh.pop %v1439
    %v1448 = vrot.slane %v1381, 6
    %v1450 = vmul.f32 %v1445, %v1448
    %1452 = vrot.lane.b32.xlu0 %v1446, 32
    %v1453 = vpop.permute.xlu0 %1452
    %v1455 = vmul.f32 %v1445, %v1453
    %1457 = vrot.lane.b32.xlu0 %v1455, 32
    %v1458 = vpop.permute.xlu0 %1457
    %v1460 = vadd.f32 %v1450, %v1458
    %v1461 = vtanh.pop %v1460
    %1463 = vrot.lane.b32.xlu0 %v1461, 32
    %v1464 = vpop.permute.xlu0 %1463
    %v1466 = vmul.f32 %v1445, %v1464
    %v1467 = vpack.c.bf16 %v1466, %v1466
    %v1469 = vrot.slane %v1467, 2
    %1470 = vrot.lane.b32.xlu0 %v1469, 64
    %v1471 = vpop.permute.xlu0 %1470
    %v1473 = vsel %vm92, %v1471, 0
    %1475 = vmatprep.subr.bf16.mxu0 0
    %1476 = vmatpush1.bf16.msra.mxu0 %v922
    %1477 = vmatprep.subr.bf16.mxu0 0
    %1478 = vmatpush1.bf16.msra.mxu0 %v923
    %1479 = vmatprep.subr.bf16.mxu0 0
    %1480 = vmatpush1.bf16.msra.mxu0 0
    %1481 = vmatprep.subr.bf16.mxu0 0
    %1482 = vmatpush1.bf16.msra.mxu0 0
    %1483 = vmatprep.subr.bf16.mxu0 0
    %1484 = vmatpush1.bf16.msra.mxu0 0
    %1485 = vmatprep.subr.bf16.mxu0 0
    %1486 = vmatpush1.bf16.msra.mxu0 0
    %1487 = vmatprep.subr.bf16.mxu0 0
    %1488 = vmatpush1.bf16.msra.mxu0 0
    %1489 = vmatprep.subr.bf16.mxu0 0
    %1490 = vmatpush1.bf16.msra.mxu0 0
    %1491 = vmatprep.subr.bf16.mxu0 0
    %1492 = vmatpush1.bf16.msra.mxu0 0
    %1493 = vmatprep.subr.bf16.mxu0 0
    %1494 = vmatpush1.bf16.msra.mxu0 0
    %1495 = vmatprep.subr.bf16.mxu0 0
    %1496 = vmatpush1.bf16.msra.mxu0 0
    %1497 = vmatprep.subr.bf16.mxu0 0
    %1498 = vmatpush1.bf16.msra.mxu0 0
    %1499 = vmatprep.subr.bf16.mxu0 0
    %1500 = vmatpush1.bf16.msra.mxu0 0
    %1501 = vmatprep.subr.bf16.mxu0 0
    %1502 = vmatpush1.bf16.msra.mxu0 0
    %1503 = vmatprep.subr.bf16.mxu0 0
    %1504 = vmatpush1.bf16.msra.mxu0 0
    %1505 = vmatprep.subr.bf16.mxu0 0
    %1506 = vmatpush1.bf16.msra.mxu0 0
    %1507 = vmatprep.mubr.bf16.mxu0 0
    %1508 = vmatmul.mubr.bf16.gmra.mrb[0].mxu0 %v1473
    %v1509 = vpop.f32.mrb[0].mxu0
    %v1510 = vadd.f32 0.0, %v1509
    %v1511 = vpop.f32.mrb[0].mxu0
    %v1512 = vpop.f32.mrb[0].mxu0
    %v1513 = vpop.f32.mrb[0].mxu0
    %1514 = vdwg.mxu0
    %v1516 = vrot.slane %v1510, 2
    %v1518 = vadd.f32 %v914, %v1516
    %v1519 = vxor.u32 %v1518, 2147483648
    %v1520 = vmul.f32 %v1519, 1.442695
    %v1521 = vpow.pop %v1520
    %v1522 = vadd.f32 %v1521, 1.0
    %v1523 = vrcp.pop %v1522
    %v1524 = vmul.f32 1.0, %v1523
    %v1525 = vtanh.pop %v1518
    %v1527 = vrot.slane %v1460, 6
    %v1529 = vmul.f32 %v1524, %v1527
    %1531 = vrot.lane.b32.xlu0 %v1525, 32
    %v1532 = vpop.permute.xlu0 %1531
    %v1534 = vmul.f32 %v1524, %v1532
    %1536 = vrot.lane.b32.xlu0 %v1534, 32
    %v1537 = vpop.permute.xlu0 %1536
    %v1539 = vadd.f32 %v1529, %v1537
    %v1540 = vtanh.pop %v1539
    %1542 = vrot.lane.b32.xlu0 %v1540, 32
    %v1543 = vpop.permute.xlu0 %1542
    %v1545 = vmul.f32 %v1524, %v1543
    %1547 = vrot.lane.b32.xlu0 %v1545, 64
    %v1548 = vpop.permute.xlu0 %1547
    %s1550 = scalar_lea.vmem %s7, 2
    %1551 = vst.msk [vmem:[%s1550 - $0x6] sm:$0xc0] %vm839, %v1548
    %1553 = vrot.lane.b32.xlu0 %v1539, 96
    %v1554 = vpop.permute.xlu0 %1553
    %s1556 = scalar_lea.vmem %s7, 6
    %1557 = vst.msk [vmem:[%s1556 - $0x6] sm:$0xc0] %vm839, %v1554
    %v1558 = vpack.c.bf16 %v1545, %v1545
    %v1559 = vld [vmem:[%s5] sm:$0xf]
    %v1560 = vld [vmem:[%s5 + $0x4] sm:$0xf]
    %v1561 = vld [vmem:[%s5 + $0x8] sm:$0xf]
    %v1562 = vld [vmem:[%s5 + $0xc] sm:$0xf]
    %v1563 = vlaneseq
    %v1564 = vshrl.u32 %v1563, 7
    %v1565 = vsub.s32 3, %v1564
    %v1566 = vrot.slane %v27, %v1565
    %v1568 = vrot.slane %v1558, 3
    %1569 = vrot.lane.b32.xlu0 %v1568, 64
    %v1570 = vpop.permute.xlu0 %1569
    %v1575 = vunpack.c.l.b16 %v1559
    %v1576 = vunpack.c.l.b16 %v1560
    %v1577 = vunpack.c.l.b16 %v1561
    %v1578 = vunpack.c.l.b16 %v1562
    %v1579 = vpack.c.b16 %v1576, %v1575
    %v1580 = vpack.c.b16 %v1578, %v1577
    %v1584 = vsel %vm92, %v1570, 0
    %1586 = vmatprep.subr.bf16.mxu0 0
    %1587 = vmatpush1.bf16.msra.mxu0 %v1579
    %1588 = vmatprep.subr.bf16.mxu0 0
    %1589 = vmatpush1.bf16.msra.mxu0 %v1580
    %1590 = vmatprep.subr.bf16.mxu0 0
    %1591 = vmatpush1.bf16.msra.mxu0 0
    %1592 = vmatprep.subr.bf16.mxu0 0
    %1593 = vmatpush1.bf16.msra.mxu0 0
    %1594 = vmatprep.subr.bf16.mxu0 0
    %1595 = vmatpush1.bf16.msra.mxu0 0
    %1596 = vmatprep.subr.bf16.mxu0 0
    %1597 = vmatpush1.bf16.msra.mxu0 0
    %1598 = vmatprep.subr.bf16.mxu0 0
    %1599 = vmatpush1.bf16.msra.mxu0 0
    %1600 = vmatprep.subr.bf16.mxu0 0
    %1601 = vmatpush1.bf16.msra.mxu0 0
    %1602 = vmatprep.subr.bf16.mxu0 0
    %1603 = vmatpush1.bf16.msra.mxu0 0
    %1604 = vmatprep.subr.bf16.mxu0 0
    %1605 = vmatpush1.bf16.msra.mxu0 0
    %1606 = vmatprep.subr.bf16.mxu0 0
    %1607 = vmatpush1.bf16.msra.mxu0 0
    %1608 = vmatprep.subr.bf16.mxu0 0
    %1609 = vmatpush1.bf16.msra.mxu0 0
    %1610 = vmatprep.subr.bf16.mxu0 0
    %1611 = vmatpush1.bf16.msra.mxu0 0
    %1612 = vmatprep.subr.bf16.mxu0 0
    %1613 = vmatpush1.bf16.msra.mxu0 0
    %1614 = vmatprep.subr.bf16.mxu0 0
    %1615 = vmatpush1.bf16.msra.mxu0 0
    %1616 = vmatprep.subr.bf16.mxu0 0
    %1617 = vmatpush1.bf16.msra.mxu0 0
    %1618 = vmatprep.mubr.bf16.mxu0 0
    %1619 = vmatmul.mubr.bf16.gmra.mrb[0].mxu0 %v1584
    %v1620 = vpop.f32.mrb[0].mxu0
    %v1621 = vadd.f32 %v1566, %v1620
    %v1622 = vpop.f32.mrb[0].mxu0
    %v1623 = vpop.f32.mrb[0].mxu0
    %v1624 = vpop.f32.mrb[0].mxu0
    %1625 = vdwg.mxu0
    %vm1626 = vcmask 17408
    %1627 = vst.msk [vmem:[#allocation3] sm:$0x3] %vm1626, %v1621
    // Predicated region
    $region26: #{compatible_lstm_predictor.1} parent=1 // pred_check
      _
    $region27: #{compatible_lstm_predictor.1} parent=1 // pred_check_branch
      %1629 = sbr.rel (0) target = $region29
    $region28: #{compatible_lstm_predictor.1} parent=1 // pred_region
      %s1631 = ssub.s32 32, 32
      %1632 = vsyncadd [#allocation4], %s1631
      %s1634 = sshll.u32 [#allocation3], 4
      %s1635 = int_to_ptr.vmem [resolvable:$true] %s1634
      %1637 = dma.vmem_to_hbm [thread:$0]  %s1635, 32, %s6, [#allocation4]
    $region29: #{compatible_lstm_predictor.1} parent=1 // pred_fallthru
      _
    // Predicated region
    $region30: #{compatible_lstm_predictor.1} parent=1 // pred_check
      _
    $region31: #{compatible_lstm_predictor.1} parent=1 // pred_check_branch
      %1639 = sbr.rel (0) target = $region33
    $region32: #{compatible_lstm_predictor.1} parent=1 // pred_region
      _
    $region33: #{compatible_lstm_predictor.1} parent=1 // pred_fallthru
      _
    // Predicated region
    $region34: #{compatible_lstm_predictor.1} parent=1 // pred_check
      _
    $region35: #{compatible_lstm_predictor.1} parent=1 // pred_check_branch
      %1641 = sbr.rel (0) target = $region37
    $region36: #{compatible_lstm_predictor.1} parent=1 // pred_region
      %1642 = dma.done [#allocation4], 32
    $region37: #{compatible_lstm_predictor.1} parent=1 // pred_fallthru
      _
    // Predicated region
    $region38: #{compatible_lstm_predictor.1} parent=1 // pred_check
      _
    $region39: #{compatible_lstm_predictor.1} parent=1 // pred_check_branch
      %1644 = sbr.rel (0) target = $region41
    $region40: #{compatible_lstm_predictor.1} parent=1 // pred_region
      _
    $region41: #{compatible_lstm_predictor.1} parent=1 // pred_fallthru
      _
    %1645 = vsyncpa [#allocation4], 1

</llo_original>
